<compile_context>
chip_gen: v7x
topology: tpu7x:2x2x1
jax: 0.10.0
libtpu: 0.0.40
codegen_flags: <defaults>
</compile_context>

<pallas_src>
import math
import numpy as np

import jax
import jax.numpy as jnp
from jax.experimental import pallas as pl
from jax.experimental.pallas import tpu as pltpu


# ----------------------------------------------------------------------------
# Packed-operand layouts (shared between wrapper packing and kernel slicing)
# ----------------------------------------------------------------------------

# Row order of the packed small-parameter operand (biases / LN params),
# followed by `nhead` head-mask rows.
_P_ROWS = ("b_q", "b_k", "b_v", "bo", "b1", "b2",
           "ln1_g", "ln1_b", "ln2_g", "ln2_b", "b_hands")
_PROW = {n: i for i, n in enumerate(_P_ROWS)}
_HEAD_MASK_ROW0 = len(_P_ROWS)

# Slab order of the packed weight operand (each slab padded to the lane width).
_W_ORDER = ("w_q", "w_k", "w_v", "wo", "w1", "w2", "w_hands")


# ----------------------------------------------------------------------------
# Fused encoder kernel (one grid step per batch group)
# ----------------------------------------------------------------------------

def _make_fused_encoder_kernel(nhead, D, ffn_dim, hand_dim, woffs):
    Dh = D // nhead
    scale = 1.0 / math.sqrt(Dh)
    F = ffn_dim
    H2 = 2 * hand_dim

    def kernel(x_ref, m_ref, bias_ref, pe_ref, w_ref, p_ref, out_ref):
        # Static slices of the two packed parameter refs are free views.
        def wslab(name, rows, cols):
            r0 = woffs[name]
            return w_ref[r0:r0 + rows, 0:cols]

        def prow(name, cols):
            i = _PROW[name]
            return p_ref[i:i + 1, 0:cols]

        def mm(a, w, b):
            return jnp.dot(a, w, preferred_element_type=jnp.float32) + b

        def ln(y, g, b):
            mu = jnp.mean(y, axis=-1, keepdims=True)
            var = jnp.mean((y - mu) ** 2, axis=-1, keepdims=True)
            return (y - mu) * jax.lax.rsqrt(var + 1e-5) * g + b

        m = m_ref[...]                                   # [Gt, 1]  mask*padding
        x = (x_ref[...] + pe_ref[...]) * m               # [Gt, D]  f32
        bias = bias_ref[0]                               # [Gt, Gt] additive bias

        # --- multi-head self-attention (1/sqrt(Dh) folded into q once) ---
        q = mm(x, wslab("w_q", D, D), prow("b_q", D)) * scale
        k = mm(x, wslab("w_k", D, D), prow("b_k", D))
        v = mm(x, wslab("w_v", D, D), prow("b_v", D))

        attn = None
        for h in range(nhead):                           # static unroll, nhead tiny
            hm = p_ref[_HEAD_MASK_ROW0 + h:_HEAD_MASK_ROW0 + h + 1, 0:D]  # [1, D]
            # Head selection via a 0/1 lane mask: no lane-offset slices, no
            # lane-axis concat, no XLU relayouts.  Extra MXU flops are free.
            s = jax.lax.dot_general(q * hm, k, (((1,), (1,)), ((), ())),
                                    preferred_element_type=jnp.float32) + bias
            s = s - jnp.max(s, axis=-1, keepdims=True)
            p = jnp.exp(s)
            p = p * pl.reciprocal(jnp.sum(p, axis=-1, keepdims=True), approx=True)
            # p @ (v * mask_h) lands head h's output directly at its lane offsets.
            contrib = jnp.dot(p, v * hm, preferred_element_type=jnp.float32)
            attn = contrib if attn is None else attn + contrib

        attn = mm(attn, wslab("wo", D, D), prow("bo", D))

        # --- post-norm encoder layer (ReLU FFN) ---
        x1 = ln(x + attn, prow("ln1_g", D), prow("ln1_b", D))
        ff = jnp.maximum(mm(x1, wslab("w1", D, F), prow("b1", F)), 0.0)
        ff = mm(ff, wslab("w2", F, D), prow("b2", D))
        x2 = ln(x1 + ff, prow("ln2_g", D), prow("ln2_b", D))

        # --- fused per-hand output heads: one lane-dense [Gt, 2*hand_dim] store ---
        outs = mm(x2, wslab("w_hands", D, H2), prow("b_hands", H2))
        out_ref[...] = outs * m

    return kernel


# ----------------------------------------------------------------------------
# Positional encodings / parameters
# ----------------------------------------------------------------------------

def _sinusoidal_pe(positions, d_model):
    """positions: int array [T] -> numpy [T, d_model] sinusoidal table."""
    pos = np.asarray(positions, dtype=np.float32)[:, None]
    i = np.arange(d_model, dtype=np.float32)
    div = np.exp(-(np.floor(i / 2.0) * 2.0) * math.log(10000.0) / d_model)
    ang = pos * div[None, :]
    pe = np.where((np.arange(d_model) % 2) == 0, np.sin(ang), np.cos(ang))
    return pe.astype(np.float32)


def init_params(key, hidden_dim, hand_dim, ffn_dim):
    """Master weights kept in float32 (MXU is idle at these shapes)."""
    def lin(k, fi, fo):
        k1, k2 = jax.random.split(k)
        w = jax.random.normal(k1, (fi, fo), jnp.float32) / math.sqrt(fi)
        b = 0.01 * jax.random.normal(k2, (fo,), jnp.float32)
        return w, b

    keys = jax.random.split(key, 8)
    p = {}
    p["w_q"], p["b_q"] = lin(keys[0], hidden_dim, hidden_dim)
    p["w_k"], p["b_k"] = lin(keys[1], hidden_dim, hidden_dim)
    p["w_v"], p["b_v"] = lin(keys[2], hidden_dim, hidden_dim)
    p["wo"], p["bo"] = lin(keys[3], hidden_dim, hidden_dim)
    p["w1"], p["b1"] = lin(keys[4], hidden_dim, ffn_dim)
    p["w2"], p["b2"] = lin(keys[5], ffn_dim, hidden_dim)
    p["ln1_g"] = jnp.ones((hidden_dim,), jnp.float32)
    p["ln1_b"] = jnp.zeros((hidden_dim,), jnp.float32)
    p["ln2_g"] = jnp.ones((hidden_dim,), jnp.float32)
    p["ln2_b"] = jnp.zeros((hidden_dim,), jnp.float32)
    p["w_l"], p["b_l"] = lin(keys[6], hidden_dim, hand_dim)
    p["w_r"], p["b_r"] = lin(keys[7], hidden_dim, hand_dim)
    return p


# ----------------------------------------------------------------------------
# Forward pass (single fused pallas_call)
# ----------------------------------------------------------------------------

def _default_num_groups(B):
    """2 grid steps on v7x (2 TensorCores/chip); 1 step on v5e/v6e (1 TC)."""
    try:
        kind = jax.devices()[0].device_kind.lower()
    except Exception:
        return 1
    if "v7" in kind and B % 2 == 0:
        return 2
    return 1


def transformer_model_forward(params, x_lhand, x_rhand,
                              mask_lhand, mask_rhand, frame_padding_mask,
                              nhead=4, num_groups=None):
    """
    x_lhand, x_rhand:        [B, L, D]
    mask_lhand, mask_rhand:  [B, L, 1]
    frame_padding_mask:      [B, L, 1]   (1.0 = valid frame, 0.0 = padded)
    nhead, num_groups:       static Python ints (jit static_argnames)
    returns (x_out_lhand, x_out_rhand): [B, L, hand_dim]
    """
    B, L, D = x_lhand.shape
    T = 2 * L
    F = params["w1"].shape[1]
    hand_dim = params["w_l"].shape[1]
    assert D % nhead == 0
    Dh = D // nhead

    if num_groups is None:
        num_groups = _default_num_groups(B)
    if B % num_groups != 0:
        num_groups = 1
    G = B // num_groups          # batch elements folded into the sublane axis
    Gt = G * T                   # token rows per grid step

    # ---- token-major inputs, blocked order [left L | right L] per batch ----
    x_tok = jnp.concatenate([x_lhand, x_rhand], axis=1).reshape(B * T, D)
    m_l = mask_lhand * frame_padding_mask
    m_r = mask_rhand * frame_padding_mask
    m_tok = jnp.concatenate([m_l, m_r], axis=1).reshape(B * T, 1)

    # ---- additive attention bias: key padding + block-diagonal over the fold ----
    fpm = frame_padding_mask[:, :, 0]                               # [B, L]
    key_valid = jnp.concatenate([fpm, fpm], axis=1)                 # [B, T]
    key_bias = jnp.where(key_valid.reshape(num_groups, Gt) != 0.0, 0.0, -1e9)
    batch_id = np.repeat(np.arange(G), T)                           # [Gt]
    block_bias = np.where(batch_id[:, None] == batch_id[None, :],
                          0.0, -1e9).astype(np.float32)             # [Gt, Gt]
    attn_bias = block_bias[None, :, :] + key_bias[:, None, :]       # [ng, Gt, Gt]

    # ---- per-hand additive PE table (trace-time constant), tiled over the fold ----
    # TODO(synk): PositionalEncoding / TransformerEncoder internals are not given
    # in the reference; we use standard sinusoidal tables, 1 post-norm layer,
    # nhead heads, ReLU FFN of size ffn_dim.
    pe_frame = _sinusoidal_pe(np.arange(L), D)                      # [L, D]
    pe_agent = _sinusoidal_pe(np.arange(2), D)                      # [2, D]
    pe_tok = np.concatenate([pe_frame + pe_agent[0:1],
                             pe_frame + pe_agent[1:2]], axis=0)     # [T, D]
    pe_group = jnp.asarray(np.tile(pe_tok, (G, 1)), jnp.float32)    # [Gt, D]

    # ---- pack all weights / small params into two shared VMEM operands ----
    w_hands = jnp.concatenate([params["w_l"], params["w_r"]], axis=1)   # [D, 2*hand]
    b_hands = jnp.concatenate([params["b_l"], params["b_r"]], axis=0)   # [2*hand]
    wdict = {"w_q": params["w_q"], "w_k": params["w_k"], "w_v": params["w_v"],
             "wo": params["wo"], "w1": params["w1"], "w2": params["w2"],
             "w_hands": w_hands}
    pack_w = max(int(wdict[n].shape[1]) for n in _W_ORDER)
    pack_w = max(pack_w, 2 * hand_dim, F, D)
    pack_w = ((pack_w + 127) // 128) * 128

    def pad_cols(a):
        a = jnp.asarray(a, jnp.float32)
        return jnp.pad(a, ((0, 0), (0, pack_w - a.shape[1])))

    woffs, r = {}, 0
    for n in _W_ORDER:
        woffs[n] = r
        r += int(wdict[n].shape[0])
    wpack = jnp.concatenate([pad_cols(wdict[n]) for n in _W_ORDER], axis=0)

    pdict = {"b_q": params["b_q"], "b_k": params["b_k"], "b_v": params["b_v"],
             "bo": params["bo"], "b1": params["b1"], "b2": params["b2"],
             "ln1_g": params["ln1_g"], "ln1_b": params["ln1_b"],
             "ln2_g": params["ln2_g"], "ln2_b": params["ln2_b"],
             "b_hands": b_hands}
    head_masks = np.zeros((nhead, D), np.float32)
    for h in range(nhead):
        head_masks[h, h * Dh:(h + 1) * Dh] = 1.0
    ppack = jnp.concatenate(
        [pad_cols(pdict[n].reshape(1, -1)) for n in _P_ROWS]
        + [pad_cols(jnp.asarray(head_masks))], axis=0)              # [11+nhead, pack_w]

    kernel = _make_fused_encoder_kernel(nhead, D, F, hand_dim, woffs)

    out_flat = pl.pallas_call(
        kernel,
        out_shape=jax.ShapeDtypeStruct((B * T, 2 * hand_dim), jnp.float32),
        grid=(num_groups,),
        in_specs=[
            pl.BlockSpec((Gt, D), lambda g: (g, 0)),                # x tokens
            pl.BlockSpec((Gt, 1), lambda g: (g, 0)),                # token mask
            pl.BlockSpec((1, Gt, Gt), lambda g: (g, 0, 0)),         # attention bias
            pl.BlockSpec((Gt, D), lambda g: (0, 0)),                # PE (shared)
            pl.BlockSpec(wpack.shape, lambda g: (0, 0)),            # packed weights
            pl.BlockSpec(ppack.shape, lambda g: (0, 0)),            # packed params
        ],
        out_specs=pl.BlockSpec((Gt, 2 * hand_dim), lambda g: (g, 0)),
        compiler_params=pltpu.CompilerParams(
            dimension_semantics=("parallel",)),
    )(x_tok, m_tok, attn_bias, pe_group, wpack, ppack)

    out = out_flat.reshape(B, T, 2 * hand_dim)
    x_out_lhand = out[:, :L, :hand_dim]
    x_out_rhand = out[:, L:, hand_dim:]
    return x_out_lhand, x_out_rhand


# ----------------------------------------------------------------------------
# Pure-JAX reference (for numerical sanity check)
# ----------------------------------------------------------------------------

def reference_forward(params, x_lhand, x_rhand, mask_lhand, mask_rhand,
                      frame_padding_mask, nhead):
    B, L, D = x_lhand.shape
    T = 2 * L
    Dh = D // nhead
    pe_frame = jnp.asarray(_sinusoidal_pe(np.arange(L), D))
    pe_agent = jnp.asarray(_sinusoidal_pe(np.arange(2), D))
    m_l = mask_lhand * frame_padding_mask
    m_r = mask_rhand * frame_padding_mask
    xl = (x_lhand + pe_frame[None] + pe_agent[0]) * m_l
    xr = (x_rhand + pe_frame[None] + pe_agent[1]) * m_r
    x = jnp.concatenate([xl, xr], axis=1)                           # [B, T, D]
    key_valid = jnp.concatenate([frame_padding_mask[:, :, 0]] * 2, axis=1)
    bias = jnp.where(key_valid != 0.0, 0.0, -1e9)[:, None, None, :]

    def proj(a, w, b):
        return a @ w + b

    def split(a):
        return a.reshape(B, T, nhead, Dh).transpose(0, 2, 1, 3)

    q = split(proj(x, params["w_q"], params["b_q"])) / math.sqrt(Dh)
    k = split(proj(x, params["w_k"], params["b_k"]))
    v = split(proj(x, params["w_v"], params["b_v"]))
    s = jnp.einsum("bhqd,bhkd->bhqk", q, k) + bias
    p = jax.nn.softmax(s, axis=-1)
    o = jnp.einsum("bhqk,bhkd->bhqd", p, v).transpose(0, 2, 1, 3).reshape(B, T, D)
    o = proj(o, params["wo"], params["bo"])

    def ln(y, g, b):
        mu = y.mean(-1, keepdims=True)
        var = ((y - mu) ** 2).mean(-1, keepdims=True)
        return (y - mu) * jax.lax.rsqrt(var + 1e-5) * g + b

    x1 = ln(x + o, params["ln1_g"], params["ln1_b"])
    ff = jnp.maximum(proj(x1, params["w1"], params["b1"]), 0.0)
    ff = proj(ff, params["w2"], params["b2"])
    x2 = ln(x1 + ff, params["ln2_g"], params["ln2_b"])
    out_l = proj(x2[:, :L], params["w_l"], params["b_l"]) * m_l
    out_r = proj(x2[:, L:], params["w_r"], params["b_r"]) * m_r
    return out_l, out_r


# ----------------------------------------------------------------------------
# main
# ----------------------------------------------------------------------------

if __name__ == "__main__":
    B, L = 2, 8
    hidden_dim, hand_dim = 32, 16
    nhead, ffn_dim = 4, 2 * hidden_dim

    key = jax.random.PRNGKey(0)
    k_par, k_xl, k_xr, k_ml, k_mr = jax.random.split(key, 5)

    params = init_params(k_par, hidden_dim, hand_dim, ffn_dim)

    x_lhand = jax.random.normal(k_xl, (B, L, hidden_dim), jnp.float32)
    x_rhand = jax.random.normal(k_xr, (B, L, hidden_dim), jnp.float32)
    mask_lhand = (jax.random.uniform(k_ml, (B, L, 1)) > 0.2).astype(jnp.float32)
    mask_rhand = (jax.random.uniform(k_mr, (B, L, 1)) > 0.2).astype(jnp.float32)
    # last two frames are padding
    frame_padding_mask = jnp.concatenate(
        [jnp.ones((B, L - 2, 1), jnp.float32), jnp.zeros((B, 2, 1), jnp.float32)],
        axis=1)

    fwd = jax.jit(transformer_model_forward,
                  static_argnames=("nhead", "num_groups"))
    out_l, out_r = fwd(params, x_lhand, x_rhand,
                       mask_lhand, mask_rhand, frame_padding_mask, nhead=nhead)
    jax.block_until_ready((out_l, out_r))

    # numerical sanity check vs pure-JAX reference (loose tol: approx reciprocal)
    ref_l, ref_r = reference_forward(params, x_lhand, x_rhand, mask_lhand,
                                     mask_rhand, frame_padding_mask, nhead)
    np.testing.assert_allclose(np.asarray(out_l), np.asarray(ref_l),
                               rtol=2e-2, atol=2e-2)
    np.testing.assert_allclose(np.asarray(out_r), np.asarray(ref_r),
                               rtol=2e-2, atol=2e-2)

    assert out_l.shape == (B, L, hand_dim) and out_r.shape == (B, L, hand_dim)
    assert bool(jnp.all(jnp.isfinite(out_l))) and bool(jnp.all(jnp.isfinite(out_r)))
    print("KERNEL_OK")
</pallas_src>

<mosaic_0001>
module attributes {stable_mosaic.version = 11 : i64} {
  func.func @kernel(%arg0: i32, %arg1: memref<32x32xf32, #tpu.memory_space<vmem>>, %arg2: memref<32x1xf32, #tpu.memory_space<vmem>>, %arg3: memref<1x32x32xf32, #tpu.memory_space<vmem>>, %arg4: memref<32x32xf32, #tpu.memory_space<vmem>>, %arg5: memref<256x128xf32, #tpu.memory_space<vmem>>, %arg6: memref<15x128xf32, #tpu.memory_space<vmem>>, %arg7: memref<32x32xf32, #tpu.memory_space<vmem>>) attributes {dimension_semantics = [#tpu.dimension_semantics<parallel>], iteration_bounds = array<i64: 1>, scalar_prefetch = 0 : i64, scratch_operands = 0 : i64, tpu.core_type = #tpu.core_type<tc>, window_params = [{transform_indices = @transform_0, window_bounds = array<i64: 32, 32>}, {transform_indices = @transform_1, window_bounds = array<i64: 32, 1>}, {transform_indices = @transform_2, window_bounds = array<i64: 1, 32, 32>}, {pipeline_mode = #tpu.pipeline_mode<synchronous>, transform_indices = @transform_3, window_bounds = array<i64: 32, 32>}, {pipeline_mode = #tpu.pipeline_mode<synchronous>, transform_indices = @transform_4, window_bounds = array<i64: 256, 128>}, {pipeline_mode = #tpu.pipeline_mode<synchronous>, transform_indices = @transform_5, window_bounds = array<i64: 15, 128>}, {transform_indices = @transform_6, window_bounds = array<i64: 32, 32>}]} {
    %c0 = arith.constant 0 : index
    %c0_0 = arith.constant 0 : index
    %0 = vector.load %arg2[%c0, %c0_0] : memref<32x1xf32, #tpu.memory_space<vmem>>, vector<32x1xf32>
    %c0_1 = arith.constant 0 : index
    %c0_2 = arith.constant 0 : index
    %1 = vector.load %arg1[%c0_1, %c0_2] : memref<32x32xf32, #tpu.memory_space<vmem>>, vector<32x32xf32>
    %c0_3 = arith.constant 0 : index
    %c0_4 = arith.constant 0 : index
    %2 = vector.load %arg4[%c0_3, %c0_4] : memref<32x32xf32, #tpu.memory_space<vmem>>, vector<32x32xf32>
    %3 = arith.addf %1, %2 : vector<32x32xf32>
    %4 = vector.broadcast %0 : vector<32x1xf32> to vector<32x32xf32>
    %5 = arith.mulf %3, %4 : vector<32x32xf32>
    %c0_5 = arith.constant 0 : index
    %c0_6 = arith.constant 0 : index
    %c0_7 = arith.constant 0 : index
    %6 = vector.load %arg3[%c0_5, %c0_6, %c0_7] : memref<1x32x32xf32, #tpu.memory_space<vmem>>, vector<1x32x32xf32>
    %7 = vector.shape_cast %6 : vector<1x32x32xf32> to vector<32x32xf32>
    %c0_8 = arith.constant 0 : index
    %c0_9 = arith.constant 0 : index
    %8 = vector.load %arg5[%c0_8, %c0_9] : memref<256x128xf32, #tpu.memory_space<vmem>>, vector<32x32xf32>
    %c0_10 = arith.constant 0 : index
    %c0_11 = arith.constant 0 : index
    %9 = vector.load %arg6[%c0_10, %c0_11] : memref<15x128xf32, #tpu.memory_space<vmem>>, vector<1x32xf32>
    %cst = arith.constant dense<0.000000e+00> : vector<32x32xf32>
    %10 = tpu.matmul %5, %8, %cst {dimension_numbers = #tpu.dot_dimension_numbers<[1], [0], [0], [1], [0, 0, 1, 1], [], []>} : vector<32x32xf32>, vector<32x32xf32>, vector<32x32xf32> -> vector<32x32xf32>
    %11 = vector.broadcast %9 : vector<1x32xf32> to vector<32x32xf32>
    %12 = arith.addf %10, %11 : vector<32x32xf32>
    %cst_12 = arith.constant 0.353553385 : f32
    %13 = vector.broadcast %cst_12 : f32 to vector<32x32xf32>
    %14 = arith.mulf %12, %13 : vector<32x32xf32>
    %c32 = arith.constant 32 : index
    %c0_13 = arith.constant 0 : index
    %15 = vector.load %arg5[%c32, %c0_13] : memref<256x128xf32, #tpu.memory_space<vmem>>, vector<32x32xf32>
    %c1 = arith.constant 1 : index
    %c0_14 = arith.constant 0 : index
    %16 = vector.load %arg6[%c1, %c0_14] : memref<15x128xf32, #tpu.memory_space<vmem>>, vector<1x32xf32>
    %cst_15 = arith.constant dense<0.000000e+00> : vector<32x32xf32>
    %17 = tpu.matmul %5, %15, %cst_15 {dimension_numbers = #tpu.dot_dimension_numbers<[1], [0], [0], [1], [0, 0, 1, 1], [], []>} : vector<32x32xf32>, vector<32x32xf32>, vector<32x32xf32> -> vector<32x32xf32>
    %18 = vector.broadcast %16 : vector<1x32xf32> to vector<32x32xf32>
    %19 = arith.addf %17, %18 : vector<32x32xf32>
    %c64 = arith.constant 64 : index
    %c0_16 = arith.constant 0 : index
    %20 = vector.load %arg5[%c64, %c0_16] : memref<256x128xf32, #tpu.memory_space<vmem>>, vector<32x32xf32>
    %c2 = arith.constant 2 : index
    %c0_17 = arith.constant 0 : index
    %21 = vector.load %arg6[%c2, %c0_17] : memref<15x128xf32, #tpu.memory_space<vmem>>, vector<1x32xf32>
    %cst_18 = arith.constant dense<0.000000e+00> : vector<32x32xf32>
    %22 = tpu.matmul %5, %20, %cst_18 {dimension_numbers = #tpu.dot_dimension_numbers<[1], [0], [0], [1], [0, 0, 1, 1], [], []>} : vector<32x32xf32>, vector<32x32xf32>, vector<32x32xf32> -> vector<32x32xf32>
    %23 = vector.broadcast %21 : vector<1x32xf32> to vector<32x32xf32>
    %24 = arith.addf %22, %23 : vector<32x32xf32>
    %c11 = arith.constant 11 : index
    %c0_19 = arith.constant 0 : index
    %25 = vector.load %arg6[%c11, %c0_19] : memref<15x128xf32, #tpu.memory_space<vmem>>, vector<1x32xf32>
    %26 = vector.broadcast %25 : vector<1x32xf32> to vector<32x32xf32>
    %27 = arith.mulf %14, %26 : vector<32x32xf32>
    %cst_20 = arith.constant dense<0.000000e+00> : vector<32x32xf32>
    %28 = tpu.matmul %27, %19, %cst_20 {dimension_numbers = #tpu.dot_dimension_numbers<[1], [1], [0], [0], [0, 0, 1, 0], [], []>} : vector<32x32xf32>, vector<32x32xf32>, vector<32x32xf32> -> vector<32x32xf32>
    %29 = arith.addf %28, %7 : vector<32x32xf32>
    %cst_21 = arith.constant dense<0xFF800000> : vector<32xf32>
    %30 = vector.multi_reduction <maximumf>, %29, %cst_21 [1] : vector<32x32xf32> to vector<32xf32>
    %31 = vector.shape_cast %30 : vector<32xf32> to vector<32x1xf32>
    %32 = vector.broadcast %31 : vector<32x1xf32> to vector<32x32xf32>
    %33 = arith.subf %29, %32 : vector<32x32xf32>
    %34 = math.exp %33 : vector<32x32xf32>
    %cst_22 = arith.constant dense<0.000000e+00> : vector<32xf32>
    %35 = vector.multi_reduction <add>, %34, %cst_22 [1] : vector<32x32xf32> to vector<32xf32>
    %36 = vector.shape_cast %35 : vector<32xf32> to vector<32x1xf32>
    %37 = tpu.reciprocal %36 {approx = true} : vector<32x1xf32> -> vector<32x1xf32>
    %38 = vector.broadcast %37 : vector<32x1xf32> to vector<32x32xf32>
    %39 = arith.mulf %34, %38 : vector<32x32xf32>
    %40 = vector.broadcast %25 : vector<1x32xf32> to vector<32x32xf32>
    %41 = arith.mulf %24, %40 : vector<32x32xf32>
    %cst_23 = arith.constant dense<0.000000e+00> : vector<32x32xf32>
    %42 = tpu.matmul %39, %41, %cst_23 {dimension_numbers = #tpu.dot_dimension_numbers<[1], [0], [0], [1], [0, 0, 1, 1], [], []>} : vector<32x32xf32>, vector<32x32xf32>, vector<32x32xf32> -> vector<32x32xf32>
    %c12 = arith.constant 12 : index
    %c0_24 = arith.constant 0 : index
    %43 = vector.load %arg6[%c12, %c0_24] : memref<15x128xf32, #tpu.memory_space<vmem>>, vector<1x32xf32>
    %44 = vector.broadcast %43 : vector<1x32xf32> to vector<32x32xf32>
    %45 = arith.mulf %14, %44 : vector<32x32xf32>
    %cst_25 = arith.constant dense<0.000000e+00> : vector<32x32xf32>
    %46 = tpu.matmul %45, %19, %cst_25 {dimension_numbers = #tpu.dot_dimension_numbers<[1], [1], [0], [0], [0, 0, 1, 0], [], []>} : vector<32x32xf32>, vector<32x32xf32>, vector<32x32xf32> -> vector<32x32xf32>
    %47 = arith.addf %46, %7 : vector<32x32xf32>
    %cst_26 = arith.constant dense<0xFF800000> : vector<32xf32>
    %48 = vector.multi_reduction <maximumf>, %47, %cst_26 [1] : vector<32x32xf32> to vector<32xf32>
    %49 = vector.shape_cast %48 : vector<32xf32> to vector<32x1xf32>
    %50 = vector.broadcast %49 : vector<32x1xf32> to vector<32x32xf32>
    %51 = arith.subf %47, %50 : vector<32x32xf32>
    %52 = math.exp %51 : vector<32x32xf32>
    %cst_27 = arith.constant dense<0.000000e+00> : vector<32xf32>
    %53 = vector.multi_reduction <add>, %52, %cst_27 [1] : vector<32x32xf32> to vector<32xf32>
    %54 = vector.shape_cast %53 : vector<32xf32> to vector<32x1xf32>
    %55 = tpu.reciprocal %54 {approx = true} : vector<32x1xf32> -> vector<32x1xf32>
    %56 = vector.broadcast %55 : vector<32x1xf32> to vector<32x32xf32>
    %57 = arith.mulf %52, %56 : vector<32x32xf32>
    %58 = vector.broadcast %43 : vector<1x32xf32> to vector<32x32xf32>
    %59 = arith.mulf %24, %58 : vector<32x32xf32>
    %cst_28 = arith.constant dense<0.000000e+00> : vector<32x32xf32>
    %60 = tpu.matmul %57, %59, %cst_28 {dimension_numbers = #tpu.dot_dimension_numbers<[1], [0], [0], [1], [0, 0, 1, 1], [], []>} : vector<32x32xf32>, vector<32x32xf32>, vector<32x32xf32> -> vector<32x32xf32>
    %61 = arith.addf %42, %60 : vector<32x32xf32>
    %c13 = arith.constant 13 : index
    %c0_29 = arith.constant 0 : index
    %62 = vector.load %arg6[%c13, %c0_29] : memref<15x128xf32, #tpu.memory_space<vmem>>, vector<1x32xf32>
    %63 = vector.broadcast %62 : vector<1x32xf32> to vector<32x32xf32>
    %64 = arith.mulf %14, %63 : vector<32x32xf32>
    %cst_30 = arith.constant dense<0.000000e+00> : vector<32x32xf32>
    %65 = tpu.matmul %64, %19, %cst_30 {dimension_numbers = #tpu.dot_dimension_numbers<[1], [1], [0], [0], [0, 0, 1, 0], [], []>} : vector<32x32xf32>, vector<32x32xf32>, vector<32x32xf32> -> vector<32x32xf32>
    %66 = arith.addf %65, %7 : vector<32x32xf32>
    %cst_31 = arith.constant dense<0xFF800000> : vector<32xf32>
    %67 = vector.multi_reduction <maximumf>, %66, %cst_31 [1] : vector<32x32xf32> to vector<32xf32>
    %68 = vector.shape_cast %67 : vector<32xf32> to vector<32x1xf32>
    %69 = vector.broadcast %68 : vector<32x1xf32> to vector<32x32xf32>
    %70 = arith.subf %66, %69 : vector<32x32xf32>
    %71 = math.exp %70 : vector<32x32xf32>
    %cst_32 = arith.constant dense<0.000000e+00> : vector<32xf32>
    %72 = vector.multi_reduction <add>, %71, %cst_32 [1] : vector<32x32xf32> to vector<32xf32>
    %73 = vector.shape_cast %72 : vector<32xf32> to vector<32x1xf32>
    %74 = tpu.reciprocal %73 {approx = true} : vector<32x1xf32> -> vector<32x1xf32>
    %75 = vector.broadcast %74 : vector<32x1xf32> to vector<32x32xf32>
    %76 = arith.mulf %71, %75 : vector<32x32xf32>
    %77 = vector.broadcast %62 : vector<1x32xf32> to vector<32x32xf32>
    %78 = arith.mulf %24, %77 : vector<32x32xf32>
    %cst_33 = arith.constant dense<0.000000e+00> : vector<32x32xf32>
    %79 = tpu.matmul %76, %78, %cst_33 {dimension_numbers = #tpu.dot_dimension_numbers<[1], [0], [0], [1], [0, 0, 1, 1], [], []>} : vector<32x32xf32>, vector<32x32xf32>, vector<32x32xf32> -> vector<32x32xf32>
    %80 = arith.addf %61, %79 : vector<32x32xf32>
    %c14 = arith.constant 14 : index
    %c0_34 = arith.constant 0 : index
    %81 = vector.load %arg6[%c14, %c0_34] : memref<15x128xf32, #tpu.memory_space<vmem>>, vector<1x32xf32>
    %82 = vector.broadcast %81 : vector<1x32xf32> to vector<32x32xf32>
    %83 = arith.mulf %14, %82 : vector<32x32xf32>
    %cst_35 = arith.constant dense<0.000000e+00> : vector<32x32xf32>
    %84 = tpu.matmul %83, %19, %cst_35 {dimension_numbers = #tpu.dot_dimension_numbers<[1], [1], [0], [0], [0, 0, 1, 0], [], []>} : vector<32x32xf32>, vector<32x32xf32>, vector<32x32xf32> -> vector<32x32xf32>
    %85 = arith.addf %84, %7 : vector<32x32xf32>
    %cst_36 = arith.constant dense<0xFF800000> : vector<32xf32>
    %86 = vector.multi_reduction <maximumf>, %85, %cst_36 [1] : vector<32x32xf32> to vector<32xf32>
    %87 = vector.shape_cast %86 : vector<32xf32> to vector<32x1xf32>
    %88 = vector.broadcast %87 : vector<32x1xf32> to vector<32x32xf32>
    %89 = arith.subf %85, %88 : vector<32x32xf32>
    %90 = math.exp %89 : vector<32x32xf32>
    %cst_37 = arith.constant dense<0.000000e+00> : vector<32xf32>
    %91 = vector.multi_reduction <add>, %90, %cst_37 [1] : vector<32x32xf32> to vector<32xf32>
    %92 = vector.shape_cast %91 : vector<32xf32> to vector<32x1xf32>
    %93 = tpu.reciprocal %92 {approx = true} : vector<32x1xf32> -> vector<32x1xf32>
    %94 = vector.broadcast %93 : vector<32x1xf32> to vector<32x32xf32>
    %95 = arith.mulf %90, %94 : vector<32x32xf32>
    %96 = vector.broadcast %81 : vector<1x32xf32> to vector<32x32xf32>
    %97 = arith.mulf %24, %96 : vector<32x32xf32>
    %cst_38 = arith.constant dense<0.000000e+00> : vector<32x32xf32>
    %98 = tpu.matmul %95, %97, %cst_38 {dimension_numbers = #tpu.dot_dimension_numbers<[1], [0], [0], [1], [0, 0, 1, 1], [], []>} : vector<32x32xf32>, vector<32x32xf32>, vector<32x32xf32> -> vector<32x32xf32>
    %99 = arith.addf %80, %98 : vector<32x32xf32>
    %c96 = arith.constant 96 : index
    %c0_39 = arith.constant 0 : index
    %100 = vector.load %arg5[%c96, %c0_39] : memref<256x128xf32, #tpu.memory_space<vmem>>, vector<32x32xf32>
    %c3 = arith.constant 3 : index
    %c0_40 = arith.constant 0 : index
    %101 = vector.load %arg6[%c3, %c0_40] : memref<15x128xf32, #tpu.memory_space<vmem>>, vector<1x32xf32>
    %cst_41 = arith.constant dense<0.000000e+00> : vector<32x32xf32>
    %102 = tpu.matmul %99, %100, %cst_41 {dimension_numbers = #tpu.dot_dimension_numbers<[1], [0], [0], [1], [0, 0, 1, 1], [], []>} : vector<32x32xf32>, vector<32x32xf32>, vector<32x32xf32> -> vector<32x32xf32>
    %103 = vector.broadcast %101 : vector<1x32xf32> to vector<32x32xf32>
    %104 = arith.addf %102, %103 : vector<32x32xf32>
    %105 = arith.addf %5, %104 : vector<32x32xf32>
    %c6 = arith.constant 6 : index
    %c0_42 = arith.constant 0 : index
    %106 = vector.load %arg6[%c6, %c0_42] : memref<15x128xf32, #tpu.memory_space<vmem>>, vector<1x32xf32>
    %c7 = arith.constant 7 : index
    %c0_43 = arith.constant 0 : index
    %107 = vector.load %arg6[%c7, %c0_43] : memref<15x128xf32, #tpu.memory_space<vmem>>, vector<1x32xf32>
    %cst_44 = arith.constant dense<0.000000e+00> : vector<32xf32>
    %108 = vector.multi_reduction <add>, %105, %cst_44 [1] : vector<32x32xf32> to vector<32xf32>
    %109 = vector.shape_cast %108 : vector<32xf32> to vector<32x1xf32>
    %cst_45 = arith.constant 3.200000e+01 : f32
    %110 = vector.broadcast %cst_45 : f32 to vector<32x1xf32>
    %111 = arith.divf %109, %110 : vector<32x1xf32>
    %112 = vector.broadcast %111 : vector<32x1xf32> to vector<32x32xf32>
    %113 = arith.subf %105, %112 : vector<32x32xf32>
    %114 = arith.mulf %113, %113 : vector<32x32xf32>
    %cst_46 = arith.constant dense<0.000000e+00> : vector<32xf32>
    %115 = vector.multi_reduction <add>, %114, %cst_46 [1] : vector<32x32xf32> to vector<32xf32>
    %116 = vector.shape_cast %115 : vector<32xf32> to vector<32x1xf32>
    %cst_47 = arith.constant 3.200000e+01 : f32
    %117 = vector.broadcast %cst_47 : f32 to vector<32x1xf32>
    %118 = arith.divf %116, %117 : vector<32x1xf32>
    %119 = vector.broadcast %111 : vector<32x1xf32> to vector<32x32xf32>
    %120 = arith.subf %105, %119 : vector<32x32xf32>
    %cst_48 = arith.constant 9.99999974E-6 : f32
    %121 = vector.broadcast %cst_48 : f32 to vector<32x1xf32>
    %122 = arith.addf %118, %121 : vector<32x1xf32>
    %123 = math.rsqrt %122 : vector<32x1xf32>
    %124 = vector.broadcast %123 : vector<32x1xf32> to vector<32x32xf32>
    %125 = arith.mulf %120, %124 : vector<32x32xf32>
    %126 = vector.broadcast %106 : vector<1x32xf32> to vector<32x32xf32>
    %127 = arith.mulf %125, %126 : vector<32x32xf32>
    %128 = vector.broadcast %107 : vector<1x32xf32> to vector<32x32xf32>
    %129 = arith.addf %127, %128 : vector<32x32xf32>
    %c128 = arith.constant 128 : index
    %c0_49 = arith.constant 0 : index
    %130 = vector.load %arg5[%c128, %c0_49] : memref<256x128xf32, #tpu.memory_space<vmem>>, vector<32x64xf32>
    %c4 = arith.constant 4 : index
    %c0_50 = arith.constant 0 : index
    %131 = vector.load %arg6[%c4, %c0_50] : memref<15x128xf32, #tpu.memory_space<vmem>>, vector<1x64xf32>
    %cst_51 = arith.constant dense<0.000000e+00> : vector<32x64xf32>
    %132 = tpu.matmul %129, %130, %cst_51 {dimension_numbers = #tpu.dot_dimension_numbers<[1], [0], [0], [1], [0, 0, 1, 1], [], []>} : vector<32x32xf32>, vector<32x64xf32>, vector<32x64xf32> -> vector<32x64xf32>
    %133 = vector.broadcast %131 : vector<1x64xf32> to vector<32x64xf32>
    %134 = arith.addf %132, %133 : vector<32x64xf32>
    %cst_52 = arith.constant 0.000000e+00 : f32
    %135 = vector.broadcast %cst_52 : f32 to vector<32x64xf32>
    %136 = arith.maximumf %134, %135 : vector<32x64xf32>
    %c160 = arith.constant 160 : index
    %c0_53 = arith.constant 0 : index
    %137 = vector.load %arg5[%c160, %c0_53] : memref<256x128xf32, #tpu.memory_space<vmem>>, vector<64x32xf32>
    %c5 = arith.constant 5 : index
    %c0_54 = arith.constant 0 : index
    %138 = vector.load %arg6[%c5, %c0_54] : memref<15x128xf32, #tpu.memory_space<vmem>>, vector<1x32xf32>
    %cst_55 = arith.constant dense<0.000000e+00> : vector<32x32xf32>
    %139 = tpu.matmul %136, %137, %cst_55 {dimension_numbers = #tpu.dot_dimension_numbers<[1], [0], [0], [1], [0, 0, 1, 1], [], []>} : vector<32x64xf32>, vector<64x32xf32>, vector<32x32xf32> -> vector<32x32xf32>
    %140 = vector.broadcast %138 : vector<1x32xf32> to vector<32x32xf32>
    %141 = arith.addf %139, %140 : vector<32x32xf32>
    %142 = arith.addf %129, %141 : vector<32x32xf32>
    %c8 = arith.constant 8 : index
    %c0_56 = arith.constant 0 : index
    %143 = vector.load %arg6[%c8, %c0_56] : memref<15x128xf32, #tpu.memory_space<vmem>>, vector<1x32xf32>
    %c9 = arith.constant 9 : index
    %c0_57 = arith.constant 0 : index
    %144 = vector.load %arg6[%c9, %c0_57] : memref<15x128xf32, #tpu.memory_space<vmem>>, vector<1x32xf32>
    %cst_58 = arith.constant dense<0.000000e+00> : vector<32xf32>
    %145 = vector.multi_reduction <add>, %142, %cst_58 [1] : vector<32x32xf32> to vector<32xf32>
    %146 = vector.shape_cast %145 : vector<32xf32> to vector<32x1xf32>
    %cst_59 = arith.constant 3.200000e+01 : f32
    %147 = vector.broadcast %cst_59 : f32 to vector<32x1xf32>
    %148 = arith.divf %146, %147 : vector<32x1xf32>
    %149 = vector.broadcast %148 : vector<32x1xf32> to vector<32x32xf32>
    %150 = arith.subf %142, %149 : vector<32x32xf32>
    %151 = arith.mulf %150, %150 : vector<32x32xf32>
    %cst_60 = arith.constant dense<0.000000e+00> : vector<32xf32>
    %152 = vector.multi_reduction <add>, %151, %cst_60 [1] : vector<32x32xf32> to vector<32xf32>
    %153 = vector.shape_cast %152 : vector<32xf32> to vector<32x1xf32>
    %cst_61 = arith.constant 3.200000e+01 : f32
    %154 = vector.broadcast %cst_61 : f32 to vector<32x1xf32>
    %155 = arith.divf %153, %154 : vector<32x1xf32>
    %156 = vector.broadcast %148 : vector<32x1xf32> to vector<32x32xf32>
    %157 = arith.subf %142, %156 : vector<32x32xf32>
    %cst_62 = arith.constant 9.99999974E-6 : f32
    %158 = vector.broadcast %cst_62 : f32 to vector<32x1xf32>
    %159 = arith.addf %155, %158 : vector<32x1xf32>
    %160 = math.rsqrt %159 : vector<32x1xf32>
    %161 = vector.broadcast %160 : vector<32x1xf32> to vector<32x32xf32>
    %162 = arith.mulf %157, %161 : vector<32x32xf32>
    %163 = vector.broadcast %143 : vector<1x32xf32> to vector<32x32xf32>
    %164 = arith.mulf %162, %163 : vector<32x32xf32>
    %165 = vector.broadcast %144 : vector<1x32xf32> to vector<32x32xf32>
    %166 = arith.addf %164, %165 : vector<32x32xf32>
    %c224 = arith.constant 224 : index
    %c0_63 = arith.constant 0 : index
    %167 = vector.load %arg5[%c224, %c0_63] : memref<256x128xf32, #tpu.memory_space<vmem>>, vector<32x32xf32>
    %c10 = arith.constant 10 : index
    %c0_64 = arith.constant 0 : index
    %168 = vector.load %arg6[%c10, %c0_64] : memref<15x128xf32, #tpu.memory_space<vmem>>, vector<1x32xf32>
    %cst_65 = arith.constant dense<0.000000e+00> : vector<32x32xf32>
    %169 = tpu.matmul %166, %167, %cst_65 {dimension_numbers = #tpu.dot_dimension_numbers<[1], [0], [0], [1], [0, 0, 1, 1], [], []>} : vector<32x32xf32>, vector<32x32xf32>, vector<32x32xf32> -> vector<32x32xf32>
    %170 = vector.broadcast %168 : vector<1x32xf32> to vector<32x32xf32>
    %171 = arith.addf %169, %170 : vector<32x32xf32>
    %172 = vector.broadcast %0 : vector<32x1xf32> to vector<32x32xf32>
    %173 = arith.mulf %171, %172 : vector<32x32xf32>
    %c0_66 = arith.constant 0 : index
    %c0_67 = arith.constant 0 : index
    %174 = vector.load %arg7[%c0_66, %c0_67] : memref<32x32xf32, #tpu.memory_space<vmem>>, vector<32x32xf32>
    tpu.vector_store %arg7[%c0_66, %c0_67], %173 {strides = array<i32>} : memref<32x32xf32, #tpu.memory_space<vmem>>, vector<32x32xf32>,
    return
  }
  func.func @transform_0(%arg0: i32) -> (i32, i32) {
    %c0_i32 = arith.constant 0 : i32
    %c0_i32_0 = arith.constant 0 : i32
    return %arg0, %c0_i32 : i32, i32
  }
  func.func @transform_1(%arg0: i32) -> (i32, i32) {
    %c0_i32 = arith.constant 0 : i32
    %c0_i32_0 = arith.constant 0 : i32
    return %arg0, %c0_i32 : i32, i32
  }
  func.func @transform_2(%arg0: i32) -> (i32, i32, i32) {
    %c0_i32 = arith.constant 0 : i32
    %c0_i32_0 = arith.constant 0 : i32
    %c0_i32_1 = arith.constant 0 : i32
    return %arg0, %c0_i32, %c0_i32_0 : i32, i32, i32
  }
  func.func @transform_3(%arg0: i32) -> (i32, i32) {
    %c0_i32 = arith.constant 0 : i32
    %c0_i32_0 = arith.constant 0 : i32
    %c0_i32_1 = arith.constant 0 : i32
    return %c0_i32, %c0_i32_0 : i32, i32
  }
  func.func @transform_4(%arg0: i32) -> (i32, i32) {
    %c0_i32 = arith.constant 0 : i32
    %c0_i32_0 = arith.constant 0 : i32
    %c0_i32_1 = arith.constant 0 : i32
    return %c0_i32, %c0_i32_0 : i32, i32
  }
  func.func @transform_5(%arg0: i32) -> (i32, i32) {
    %c0_i32 = arith.constant 0 : i32
    %c0_i32_0 = arith.constant 0 : i32
    %c0_i32_1 = arith.constant 0 : i32
    return %c0_i32, %c0_i32_0 : i32, i32
  }
  func.func @transform_6(%arg0: i32) -> (i32, i32) {
    %c0_i32 = arith.constant 0 : i32
    %c0_i32_0 = arith.constant 0 : i32
    return %arg0, %c0_i32 : i32, i32
  }
}

</mosaic_0001>

<llo_original>
// kernel: transformer_model_forward.1
$region0: #{transformer_model_forward.1}
  #allocation0 [shape = 'u32[]', space=smem, size = 0x4, offset = 0x4, fixed_abs, tag = 'smem constant byte address 0x4 - core index']
  #allocation1 [shape = 'u32[144,128]{1,0:T(1,128)}', space=vmem, size = 0x12000, scoped, tag = 'internal scratch']
  %s0 = inlined_call_operand.vmem [shape: f32[32,32], index: 0, kind: input, shape index: {}]
  %s1 = inlined_call_operand.vmem [shape: f32[32,1], index: 1, kind: input, shape index: {}]
  %s2 = inlined_call_operand.vmem [shape: f32[1,32,32], index: 2, kind: input, shape index: {}]
  %s3 = inlined_call_operand.vmem [shape: f32[32,32], index: 3, kind: input, shape index: {}]
  %s4 = inlined_call_operand.vmem [shape: f32[256,128], index: 4, kind: input, shape index: {}]
  %s5 = inlined_call_operand.vmem [shape: f32[15,128], index: 5, kind: input, shape index: {}]
  %s6 = inlined_call_operand.vmem [shape: f32[32,32], index: 6, kind: output, shape index: {}]
  %s7 = sld [smem:[#allocation0]]
  $region34: #{transformer_model_forward.1} parent=0
    _
  %s9 = ssub.s32 1, %s7
  %s10 = scalar_select 0, %s9, %s7
  // Predicated region
  $region2: #{transformer_model_forward.1} parent=0 // pred_check
    _
  $region3: #{transformer_model_forward.1} parent=0 // pred_check_branch
    %12 = sbr.rel (0) target = $region5
  $region4: #{transformer_model_forward.1} parent=0 // pred_region
    _
  $region5: #{transformer_model_forward.1} parent=0 // pred_fallthru
    _
  // Predicated region
  $region6: #{transformer_model_forward.1} parent=0 // pred_check
    _
  $region7: #{transformer_model_forward.1} parent=0 // pred_check_branch
    %14 = sbr.rel (0) target = $region9
  $region8: #{transformer_model_forward.1} parent=0 // pred_region
    _
  $region9: #{transformer_model_forward.1} parent=0 // pred_fallthru
    _
  // Predicated region
  $region10: #{transformer_model_forward.1} parent=0 // pred_check
    _
  $region11: #{transformer_model_forward.1} parent=0 // pred_check_branch
    %16 = sbr.rel (0) target = $region13
  $region12: #{transformer_model_forward.1} parent=0 // pred_region
    _
  $region13: #{transformer_model_forward.1} parent=0 // pred_fallthru
    _
  // Predicated region
  $region14: #{transformer_model_forward.1} parent=0 // pred_check
    _
  $region15: #{transformer_model_forward.1} parent=0 // pred_check_branch
    %18 = sbr.rel (0) target = $region17
  $region16: #{transformer_model_forward.1} parent=0 // pred_region
    _
  $region17: #{transformer_model_forward.1} parent=0 // pred_fallthru
    _
  // Predicated region
  $region18: #{transformer_model_forward.1} parent=0 // pred_check
    _
  $region19: #{transformer_model_forward.1} parent=0 // pred_check_branch
    %20 = sbr.rel (0) target = $region21
  $region20: #{transformer_model_forward.1} parent=0 // pred_region
    _
  $region21: #{transformer_model_forward.1} parent=0 // pred_fallthru
    _
  // Predicated region
  $region22: #{transformer_model_forward.1} parent=0 // pred_check
    _
  $region23: #{transformer_model_forward.1} parent=0 // pred_check_branch
    %22 = sbr.rel (0) target = $region25
  $region24: #{transformer_model_forward.1} parent=0 // pred_region
    _
  $region25: #{transformer_model_forward.1} parent=0 // pred_fallthru
    _
  %v23 = vld [vmem:[%s1] sm:$0xff]
  %v24 = vld [vmem:[%s1 + $0x8] sm:$0xff]
  %v25 = vld [vmem:[%s1 + $0x10] sm:$0xff]
  %v26 = vld [vmem:[%s1 + $0x18] sm:$0xff]
  %v27 = vld [vmem:[%s0] sm:$0xff]
  %v28 = vld [vmem:[%s0 + $0x8] sm:$0xff]
  %v29 = vld [vmem:[%s0 + $0x10] sm:$0xff]
  %v30 = vld [vmem:[%s0 + $0x18] sm:$0xff]
  %v31 = vld [vmem:[%s3] sm:$0xff]
  %v32 = vld [vmem:[%s3 + $0x8] sm:$0xff]
  %v33 = vld [vmem:[%s3 + $0x10] sm:$0xff]
  %v34 = vld [vmem:[%s3 + $0x18] sm:$0xff]
  %v35 = vadd.f32 %v27, %v31
  %v36 = vadd.f32 %v28, %v32
  %v37 = vadd.f32 %v29, %v33
  %v38 = vadd.f32 %v30, %v34
  %40 = vset.pattern.permute.xlu0 0
  %41 = vperm.xlu0 %40, %v23
  %v42 = vpop.permute.xlu0 %41
  %45 = vset.pattern.permute.xlu0 0
  %46 = vperm.xlu0 %45, %v24
  %v47 = vpop.permute.xlu0 %46
  %50 = vset.pattern.permute.xlu0 0
  %51 = vperm.xlu0 %50, %v25
  %v52 = vpop.permute.xlu0 %51
  %55 = vset.pattern.permute.xlu0 0
  %56 = vperm.xlu0 %55, %v26
  %v57 = vpop.permute.xlu0 %56
  %v59 = vmul.f32 %v35, %v42
  %v60 = vmul.f32 %v36, %v47
  %v61 = vmul.f32 %v37, %v52
  %v62 = vmul.f32 %v38, %v57
  %v63 = vld [vmem:[%s2] sm:$0xff]
  %v64 = vld [vmem:[%s2 + $0x8] sm:$0xff]
  %v65 = vld [vmem:[%s2 + $0x10] sm:$0xff]
  %v66 = vld [vmem:[%s2 + $0x18] sm:$0xff]
  %v67 = vld [vmem:[%s4] sm:$0xff]
  %v68 = vld [vmem:[%s4 + $0x8] sm:$0xff]
  %v69 = vld [vmem:[%s4 + $0x10] sm:$0xff]
  %v70 = vld [vmem:[%s4 + $0x18] sm:$0xff]
  %v71 = vld [vmem:[%s5] sm:$0x1]
  %v72 = vlaneseq
  %v73 = vshrl.u32 %v72, 7
  %v74 = vsub.s32 0, %v73
  %v75 = vrot.slane %v71, %v74
  %vm76 = vcmask 261120
  %v78 = vsel %vm76, %v59, 0
  %v81 = vsel %vm76, %v60, 0
  %v84 = vsel %vm76, %v61, 0
  %v87 = vsel %vm76, %v62, 0
  %89 = vmatprep.subr.mxu0 0.0
  %90 = vmatpush1.msra.mxu0 %v67
  %91 = vmatprep.subr.mxu0 0.0
  %92 = vmatpush1.msra.mxu0 %v68
  %93 = vmatprep.subr.mxu0 0.0
  %94 = vmatpush1.msra.mxu0 %v69
  %95 = vmatprep.subr.mxu0 0.0
  %96 = vmatpush1.msra.mxu0 %v70
  %97 = vmatprep.subr.mxu0 0.0
  %98 = vmatpush1.msra.mxu0 0.0
  %99 = vmatprep.subr.mxu0 0.0
  %100 = vmatpush1.msra.mxu0 0.0
  %101 = vmatprep.subr.mxu0 0.0
  %102 = vmatpush1.msra.mxu0 0.0
  %103 = vmatprep.subr.mxu0 0.0
  %104 = vmatpush1.msra.mxu0 0.0
  %105 = vmatprep.subr.mxu0 0.0
  %106 = vmatpush1.msra.mxu0 0.0
  %107 = vmatprep.subr.mxu0 0.0
  %108 = vmatpush1.msra.mxu0 0.0
  %109 = vmatprep.subr.mxu0 0.0
  %110 = vmatpush1.msra.mxu0 0.0
  %111 = vmatprep.subr.mxu0 0.0
  %112 = vmatpush1.msra.mxu0 0.0
  %113 = vmatprep.subr.mxu0 0.0
  %114 = vmatpush1.msra.mxu0 0.0
  %115 = vmatprep.subr.mxu0 0.0
  %116 = vmatpush1.msra.mxu0 0.0
  %117 = vmatprep.subr.mxu0 0.0
  %118 = vmatpush1.msra.mxu0 0.0
  %119 = vmatprep.subr.mxu0 0.0
  %120 = vmatpush1.msra.mxu0 0.0
  %121 = vmatprep.subr.mxu0 0.0
  %122 = vmatpush1.msra.mxu0 0.0
  %123 = vmatprep.subr.mxu0 0.0
  %124 = vmatpush1.msra.mxu0 0.0
  %125 = vmatprep.subr.mxu0 0.0
  %126 = vmatpush1.msra.mxu0 0.0
  %127 = vmatprep.subr.mxu0 0.0
  %128 = vmatpush1.msra.mxu0 0.0
  %129 = vmatprep.subr.mxu0 0.0
  %130 = vmatpush1.msra.mxu0 0.0
  %131 = vmatprep.subr.mxu0 0.0
  %132 = vmatpush1.msra.mxu0 0.0
  %133 = vmatprep.subr.mxu0 0.0
  %134 = vmatpush1.msra.mxu0 0.0
  %135 = vmatprep.subr.mxu0 0.0
  %136 = vmatpush1.msra.mxu0 0.0
  %137 = vmatprep.subr.mxu0 0.0
  %138 = vmatpush1.msra.mxu0 0.0
  %139 = vmatprep.subr.mxu0 0.0
  %140 = vmatpush1.msra.mxu0 0.0
  %141 = vmatprep.subr.mxu0 0.0
  %142 = vmatpush1.msra.mxu0 0.0
  %143 = vmatprep.subr.mxu0 0.0
  %144 = vmatpush1.msra.mxu0 0.0
  %145 = vmatprep.subr.mxu0 0.0
  %146 = vmatpush1.msra.mxu0 0.0
  %147 = vmatprep.subr.mxu0 0.0
  %148 = vmatpush1.msra.mxu0 0.0
  %149 = vmatprep.subr.mxu0 0.0
  %150 = vmatpush1.msra.mxu0 0.0
  %151 = vmatprep.subr.mxu0 0.0
  %152 = vmatpush1.msra.mxu0 0.0
  %153 = vmatprep.mubr.f32.mxu0 0.0
  %154 = vmatmul.mubr.f32.gmra.mrb[0].mxu0 %v78
  %v155 = vpop.f32.mrb[0].mxu0
  %v156 = vadd.f32 %v75, %v155
  %v157 = vpop.f32.mrb[0].mxu0
  %158 = vmatprep.mubr.f32.mxu0 0.0
  %159 = vmatmul.mubr.f32.gmra.mrb[0].mxu0 %v81
  %v160 = vpop.f32.mrb[0].mxu0
  %v161 = vadd.f32 %v75, %v160
  %v162 = vpop.f32.mrb[0].mxu0
  %163 = vmatprep.mubr.f32.mxu0 0.0
  %164 = vmatmul.mubr.f32.gmra.mrb[0].mxu0 %v84
  %v165 = vpop.f32.mrb[0].mxu0
  %v166 = vadd.f32 %v75, %v165
  %v167 = vpop.f32.mrb[0].mxu0
  %168 = vmatprep.mubr.f32.mxu0 0.0
  %169 = vmatmul.mubr.f32.gmra.mrb[0].mxu0 %v87
  %v170 = vpop.f32.mrb[0].mxu0
  %v171 = vadd.f32 %v75, %v170
  %v172 = vpop.f32.mrb[0].mxu0
  %173 = vdwg.mxu0
  %v174 = vmul.f32 %v156, 0.35355338
  %v175 = vmul.f32 %v161, 0.35355338
  %v176 = vmul.f32 %v166, 0.35355338
  %v177 = vmul.f32 %v171, 0.35355338
  %v178 = vld [vmem:[%s4 + $0x20] sm:$0xff]
  %v179 = vld [vmem:[%s4 + $0x28] sm:$0xff]
  %v180 = vld [vmem:[%s4 + $0x30] sm:$0xff]
  %v181 = vld [vmem:[%s4 + $0x38] sm:$0xff]
  %v182 = vld [vmem:[%s5 + $0x1] sm:$0x1]
  %v183 = vlaneseq
  %v184 = vshrl.u32 %v183, 7
  %v185 = vsub.s32 0, %v184
  %v186 = vrot.slane %v182, %v185
  %187 = vmatprep.subr.mxu0 0.0
  %188 = vmatpush1.msra.mxu0 %v178
  %189 = vmatprep.subr.mxu0 0.0
  %190 = vmatpush1.msra.mxu0 %v179
  %191 = vmatprep.subr.mxu0 0.0
  %192 = vmatpush1.msra.mxu0 %v180
  %193 = vmatprep.subr.mxu0 0.0
  %194 = vmatpush1.msra.mxu0 %v181
  %195 = vmatprep.subr.mxu0 0.0
  %196 = vmatpush1.msra.mxu0 0.0
  %197 = vmatprep.subr.mxu0 0.0
  %198 = vmatpush1.msra.mxu0 0.0
  %199 = vmatprep.subr.mxu0 0.0
  %200 = vmatpush1.msra.mxu0 0.0
  %201 = vmatprep.subr.mxu0 0.0
  %202 = vmatpush1.msra.mxu0 0.0
  %203 = vmatprep.subr.mxu0 0.0
  %204 = vmatpush1.msra.mxu0 0.0
  %205 = vmatprep.subr.mxu0 0.0
  %206 = vmatpush1.msra.mxu0 0.0
  %207 = vmatprep.subr.mxu0 0.0
  %208 = vmatpush1.msra.mxu0 0.0
  %209 = vmatprep.subr.mxu0 0.0
  %210 = vmatpush1.msra.mxu0 0.0
  %211 = vmatprep.subr.mxu0 0.0
  %212 = vmatpush1.msra.mxu0 0.0
  %213 = vmatprep.subr.mxu0 0.0
  %214 = vmatpush1.msra.mxu0 0.0
  %215 = vmatprep.subr.mxu0 0.0
  %216 = vmatpush1.msra.mxu0 0.0
  %217 = vmatprep.subr.mxu0 0.0
  %218 = vmatpush1.msra.mxu0 0.0
  %219 = vmatprep.subr.mxu0 0.0
  %220 = vmatpush1.msra.mxu0 0.0
  %221 = vmatprep.subr.mxu0 0.0
  %222 = vmatpush1.msra.mxu0 0.0
  %223 = vmatprep.subr.mxu0 0.0
  %224 = vmatpush1.msra.mxu0 0.0
  %225 = vmatprep.subr.mxu0 0.0
  %226 = vmatpush1.msra.mxu0 0.0
  %227 = vmatprep.subr.mxu0 0.0
  %228 = vmatpush1.msra.mxu0 0.0
  %229 = vmatprep.subr.mxu0 0.0
  %230 = vmatpush1.msra.mxu0 0.0
  %231 = vmatprep.subr.mxu0 0.0
  %232 = vmatpush1.msra.mxu0 0.0
  %233 = vmatprep.subr.mxu0 0.0
  %234 = vmatpush1.msra.mxu0 0.0
  %235 = vmatprep.subr.mxu0 0.0
  %236 = vmatpush1.msra.mxu0 0.0
  %237 = vmatprep.subr.mxu0 0.0
  %238 = vmatpush1.msra.mxu0 0.0
  %239 = vmatprep.subr.mxu0 0.0
  %240 = vmatpush1.msra.mxu0 0.0
  %241 = vmatprep.subr.mxu0 0.0
  %242 = vmatpush1.msra.mxu0 0.0
  %243 = vmatprep.subr.mxu0 0.0
  %244 = vmatpush1.msra.mxu0 0.0
  %245 = vmatprep.subr.mxu0 0.0
  %246 = vmatpush1.msra.mxu0 0.0
  %247 = vmatprep.subr.mxu0 0.0
  %248 = vmatpush1.msra.mxu0 0.0
  %249 = vmatprep.subr.mxu0 0.0
  %250 = vmatpush1.msra.mxu0 0.0
  %251 = vmatprep.mubr.f32.mxu0 0.0
  %252 = vmatmul.mubr.f32.gmra.mrb[0].mxu0 %v78
  %v253 = vpop.f32.mrb[0].mxu0
  %v254 = vadd.f32 %v186, %v253
  %v255 = vpop.f32.mrb[0].mxu0
  %256 = vmatprep.mubr.f32.mxu0 0.0
  %257 = vmatmul.mubr.f32.gmra.mrb[0].mxu0 %v81
  %v258 = vpop.f32.mrb[0].mxu0
  %v259 = vadd.f32 %v186, %v258
  %v260 = vpop.f32.mrb[0].mxu0
  %261 = vmatprep.mubr.f32.mxu0 0.0
  %262 = vmatmul.mubr.f32.gmra.mrb[0].mxu0 %v84
  %v263 = vpop.f32.mrb[0].mxu0
  %v264 = vadd.f32 %v186, %v263
  %v265 = vpop.f32.mrb[0].mxu0
  %266 = vmatprep.mubr.f32.mxu0 0.0
  %267 = vmatmul.mubr.f32.gmra.mrb[0].mxu0 %v87
  %v268 = vpop.f32.mrb[0].mxu0
  %v269 = vadd.f32 %v186, %v268
  %v270 = vpop.f32.mrb[0].mxu0
  %271 = vdwg.mxu0
  %v272 = vld [vmem:[%s4 + $0x40] sm:$0xff]
  %v273 = vld [vmem:[%s4 + $0x48] sm:$0xff]
  %v274 = vld [vmem:[%s4 + $0x50] sm:$0xff]
  %v275 = vld [vmem:[%s4 + $0x58] sm:$0xff]
  %v276 = vld [vmem:[%s5 + $0x2] sm:$0x1]
  %v277 = vlaneseq
  %v278 = vshrl.u32 %v277, 7
  %v279 = vsub.s32 0, %v278
  %v280 = vrot.slane %v276, %v279
  %281 = vmatprep.subr.mxu0 0.0
  %282 = vmatpush1.msra.mxu0 %v272
  %283 = vmatprep.subr.mxu0 0.0
  %284 = vmatpush1.msra.mxu0 %v273
  %285 = vmatprep.subr.mxu0 0.0
  %286 = vmatpush1.msra.mxu0 %v274
  %287 = vmatprep.subr.mxu0 0.0
  %288 = vmatpush1.msra.mxu0 %v275
  %289 = vmatprep.subr.mxu0 0.0
  %290 = vmatpush1.msra.mxu0 0.0
  %291 = vmatprep.subr.mxu0 0.0
  %292 = vmatpush1.msra.mxu0 0.0
  %293 = vmatprep.subr.mxu0 0.0
  %294 = vmatpush1.msra.mxu0 0.0
  %295 = vmatprep.subr.mxu0 0.0
  %296 = vmatpush1.msra.mxu0 0.0
  %297 = vmatprep.subr.mxu0 0.0
  %298 = vmatpush1.msra.mxu0 0.0
  %299 = vmatprep.subr.mxu0 0.0
  %300 = vmatpush1.msra.mxu0 0.0
  %301 = vmatprep.subr.mxu0 0.0
  %302 = vmatpush1.msra.mxu0 0.0
  %303 = vmatprep.subr.mxu0 0.0
  %304 = vmatpush1.msra.mxu0 0.0
  %305 = vmatprep.subr.mxu0 0.0
  %306 = vmatpush1.msra.mxu0 0.0
  %307 = vmatprep.subr.mxu0 0.0
  %308 = vmatpush1.msra.mxu0 0.0
  %309 = vmatprep.subr.mxu0 0.0
  %310 = vmatpush1.msra.mxu0 0.0
  %311 = vmatprep.subr.mxu0 0.0
  %312 = vmatpush1.msra.mxu0 0.0
  %313 = vmatprep.subr.mxu0 0.0
  %314 = vmatpush1.msra.mxu0 0.0
  %315 = vmatprep.subr.mxu0 0.0
  %316 = vmatpush1.msra.mxu0 0.0
  %317 = vmatprep.subr.mxu0 0.0
  %318 = vmatpush1.msra.mxu0 0.0
  %319 = vmatprep.subr.mxu0 0.0
  %320 = vmatpush1.msra.mxu0 0.0
  %321 = vmatprep.subr.mxu0 0.0
  %322 = vmatpush1.msra.mxu0 0.0
  %323 = vmatprep.subr.mxu0 0.0
  %324 = vmatpush1.msra.mxu0 0.0
  %325 = vmatprep.subr.mxu0 0.0
  %326 = vmatpush1.msra.mxu0 0.0
  %327 = vmatprep.subr.mxu0 0.0
  %328 = vmatpush1.msra.mxu0 0.0
  %329 = vmatprep.subr.mxu0 0.0
  %330 = vmatpush1.msra.mxu0 0.0
  %331 = vmatprep.subr.mxu0 0.0
  %332 = vmatpush1.msra.mxu0 0.0
  %333 = vmatprep.subr.mxu0 0.0
  %334 = vmatpush1.msra.mxu0 0.0
  %335 = vmatprep.subr.mxu0 0.0
  %336 = vmatpush1.msra.mxu0 0.0
  %337 = vmatprep.subr.mxu0 0.0
  %338 = vmatpush1.msra.mxu0 0.0
  %339 = vmatprep.subr.mxu0 0.0
  %340 = vmatpush1.msra.mxu0 0.0
  %341 = vmatprep.subr.mxu0 0.0
  %342 = vmatpush1.msra.mxu0 0.0
  %343 = vmatprep.subr.mxu0 0.0
  %344 = vmatpush1.msra.mxu0 0.0
  %345 = vmatprep.mubr.f32.mxu0 0.0
  %346 = vmatmul.mubr.f32.gmra.mrb[0].mxu0 %v78
  %v347 = vpop.f32.mrb[0].mxu0
  %v348 = vadd.f32 %v280, %v347
  %v349 = vpop.f32.mrb[0].mxu0
  %350 = vmatprep.mubr.f32.mxu0 0.0
  %351 = vmatmul.mubr.f32.gmra.mrb[0].mxu0 %v81
  %v352 = vpop.f32.mrb[0].mxu0
  %v353 = vadd.f32 %v280, %v352
  %v354 = vpop.f32.mrb[0].mxu0
  %355 = vmatprep.mubr.f32.mxu0 0.0
  %356 = vmatmul.mubr.f32.gmra.mrb[0].mxu0 %v84
  %v357 = vpop.f32.mrb[0].mxu0
  %v358 = vadd.f32 %v280, %v357
  %v359 = vpop.f32.mrb[0].mxu0
  %360 = vmatprep.mubr.f32.mxu0 0.0
  %361 = vmatmul.mubr.f32.gmra.mrb[0].mxu0 %v87
  %v362 = vpop.f32.mrb[0].mxu0
  %v363 = vadd.f32 %v280, %v362
  %v364 = vpop.f32.mrb[0].mxu0
  %365 = vdwg.mxu0
  %v366 = vld [vmem:[%s5 + $0xb] sm:$0x1]
  %v367 = vlaneseq
  %v368 = vshrl.u32 %v367, 7
  %v369 = vsub.s32 0, %v368
  %v370 = vrot.slane %v366, %v369
  %v371 = vmul.f32 %v174, %v370
  %v372 = vmul.f32 %v175, %v370
  %v373 = vmul.f32 %v176, %v370
  %v374 = vmul.f32 %v177, %v370
  %v376 = vsel %vm76, %v371, 0
  %v379 = vsel %vm76, %v372, 0
  %v382 = vsel %vm76, %v373, 0
  %v385 = vsel %vm76, %v374, 0
  %v388 = vsel %vm76, %v254, 0
  %v391 = vsel %vm76, %v259, 0
  %v394 = vsel %vm76, %v264, 0
  %v397 = vsel %vm76, %v269, 0
  %399 = vmatprep.subr.mxu0 0.0
  %400 = vmatpush1.xpose.msra.mxu0 %v388
  %401 = vmatprep.subr.mxu0 0.0
  %402 = vmatpush1.xpose.msra.mxu0 %v391
  %403 = vmatprep.subr.mxu0 0.0
  %404 = vmatpush1.xpose.msra.mxu0 %v394
  %405 = vmatprep.subr.mxu0 0.0
  %406 = vmatpush1.xpose.msra.mxu0 %v397
  %407 = vmatprep.subr.mxu0 0.0
  %408 = vmatpush1.xpose.msra.mxu0 0.0
  %409 = vmatprep.subr.mxu0 0.0
  %410 = vmatpush1.xpose.msra.mxu0 0.0
  %411 = vmatprep.subr.mxu0 0.0
  %412 = vmatpush1.xpose.msra.mxu0 0.0
  %413 = vmatprep.subr.mxu0 0.0
  %414 = vmatpush1.xpose.msra.mxu0 0.0
  %415 = vmatprep.subr.mxu0 0.0
  %416 = vmatpush1.xpose.msra.mxu0 0.0
  %417 = vmatprep.subr.mxu0 0.0
  %418 = vmatpush1.xpose.msra.mxu0 0.0
  %419 = vmatprep.subr.mxu0 0.0
  %420 = vmatpush1.xpose.msra.mxu0 0.0
  %421 = vmatprep.subr.mxu0 0.0
  %422 = vmatpush1.xpose.msra.mxu0 0.0
  %423 = vmatprep.subr.mxu0 0.0
  %424 = vmatpush1.xpose.msra.mxu0 0.0
  %425 = vmatprep.subr.mxu0 0.0
  %426 = vmatpush1.xpose.msra.mxu0 0.0
  %427 = vmatprep.subr.mxu0 0.0
  %428 = vmatpush1.xpose.msra.mxu0 0.0
  %429 = vmatprep.subr.mxu0 0.0
  %430 = vmatpush1.xpose.msra.mxu0 0.0
  %431 = vmatprep.subr.mxu0 0.0
  %432 = vmatpush1.xpose.msra.mxu0 0.0
  %433 = vmatprep.subr.mxu0 0.0
  %434 = vmatpush1.xpose.msra.mxu0 0.0
  %435 = vmatprep.subr.mxu0 0.0
  %436 = vmatpush1.xpose.msra.mxu0 0.0
  %437 = vmatprep.subr.mxu0 0.0
  %438 = vmatpush1.xpose.msra.mxu0 0.0
  %439 = vmatprep.subr.mxu0 0.0
  %440 = vmatpush1.xpose.msra.mxu0 0.0
  %441 = vmatprep.subr.mxu0 0.0
  %442 = vmatpush1.xpose.msra.mxu0 0.0
  %443 = vmatprep.subr.mxu0 0.0
  %444 = vmatpush1.xpose.msra.mxu0 0.0
  %445 = vmatprep.subr.mxu0 0.0
  %446 = vmatpush1.xpose.msra.mxu0 0.0
  %447 = vmatprep.subr.mxu0 0.0
  %448 = vmatpush1.xpose.msra.mxu0 0.0
  %449 = vmatprep.subr.mxu0 0.0
  %450 = vmatpush1.xpose.msra.mxu0 0.0
  %451 = vmatprep.subr.mxu0 0.0
  %452 = vmatpush1.xpose.msra.mxu0 0.0
  %453 = vmatprep.subr.mxu0 0.0
  %454 = vmatpush1.xpose.msra.mxu0 0.0
  %455 = vmatprep.subr.mxu0 0.0
  %456 = vmatpush1.xpose.msra.mxu0 0.0
  %457 = vmatprep.subr.mxu0 0.0
  %458 = vmatpush1.xpose.msra.mxu0 0.0
  %459 = vmatprep.subr.mxu0 0.0
  %460 = vmatpush1.xpose.msra.mxu0 0.0
  %461 = vmatprep.subr.mxu0 0.0
  %462 = vmatpush1.xpose.msra.mxu0 0.0
  %463 = vmatprep.mubr.f32.mxu0 0.0
  %464 = vmatmul.mubr.f32.gmra.mrb[0].mxu0 %v376
  %v465 = vpop.f32.mrb[0].mxu0
  %v466 = vadd.f32 %v63, %v465
  %v467 = vpop.f32.mrb[0].mxu0
  %468 = vmatprep.mubr.f32.mxu0 0.0
  %469 = vmatmul.mubr.f32.gmra.mrb[0].mxu0 %v379
  %v470 = vpop.f32.mrb[0].mxu0
  %v471 = vadd.f32 %v64, %v470
  %v472 = vpop.f32.mrb[0].mxu0
  %473 = vmatprep.mubr.f32.mxu0 0.0
  %474 = vmatmul.mubr.f32.gmra.mrb[0].mxu0 %v382
  %v475 = vpop.f32.mrb[0].mxu0
  %v476 = vadd.f32 %v65, %v475
  %v477 = vpop.f32.mrb[0].mxu0
  %478 = vmatprep.mubr.f32.mxu0 0.0
  %479 = vmatmul.mubr.f32.gmra.mrb[0].mxu0 %v385
  %v480 = vpop.f32.mrb[0].mxu0
  %v481 = vadd.f32 %v66, %v480
  %v482 = vpop.f32.mrb[0].mxu0
  %483 = vdwg.mxu0
  %v484 = vsel %vm76, %v466, -inf
  %485 = vmax.xlane.f32.xlu0 %v484
  %v486 = vpop.xlane.xlu0 %485
  %v487 = vsel %vm76, %v471, -inf
  %488 = vmax.xlane.f32.xlu0 %v487
  %v489 = vpop.xlane.xlu0 %488
  %v490 = vsel %vm76, %v476, -inf
  %491 = vmax.xlane.f32.xlu0 %v490
  %v492 = vpop.xlane.xlu0 %491
  %v493 = vsel %vm76, %v481, -inf
  %494 = vmax.xlane.f32.xlu0 %v493
  %v495 = vpop.xlane.xlu0 %494
  %v496 = vsub.f32 %v466, %v486
  %v497 = vsub.f32 %v471, %v489
  %v498 = vsub.f32 %v476, %v492
  %v499 = vsub.f32 %v481, %v495
  %v500 = vmul.f32 %v496, 1.442695
  %v501 = vpow.pop %v500
  %v502 = vmul.f32 %v497, 1.442695
  %v503 = vpow.pop %v502
  %v504 = vmul.f32 %v498, 1.442695
  %v505 = vpow.pop %v504
  %v506 = vmul.f32 %v499, 1.442695
  %v507 = vpow.pop %v506
  %v508 = vsel %vm76, %v501, 0.0
  %509 = vadd.xlane.f32.xlu0 %v508
  %v510 = vpop.xlane.xlu0 %509
  %v511 = vsel %vm76, %v503, 0.0
  %512 = vadd.xlane.f32.xlu0 %v511
  %v513 = vpop.xlane.xlu0 %512
  %v514 = vsel %vm76, %v505, 0.0
  %515 = vadd.xlane.f32.xlu0 %v514
  %v516 = vpop.xlane.xlu0 %515
  %v517 = vsel %vm76, %v507, 0.0
  %518 = vadd.xlane.f32.xlu0 %v517
  %v519 = vpop.xlane.xlu0 %518
  %v520 = vrcp.pop %v510
  %v521 = vrcp.pop %v513
  %v522 = vrcp.pop %v516
  %v523 = vrcp.pop %v519
  %v524 = vmul.f32 %v501, %v520
  %v525 = vmul.f32 %v503, %v521
  %v526 = vmul.f32 %v505, %v522
  %v527 = vmul.f32 %v507, %v523
  %v528 = vmul.f32 %v348, %v370
  %v529 = vmul.f32 %v353, %v370
  %v530 = vmul.f32 %v358, %v370
  %v531 = vmul.f32 %v363, %v370
  %v532 = vld [vmem:[%s5 + $0xc] sm:$0x1]
  %v533 = vlaneseq
  %v534 = vshrl.u32 %v533, 7
  %v535 = vsub.s32 0, %v534
  %v536 = vrot.slane %v532, %v535
  %v537 = vmul.f32 %v174, %v536
  %v538 = vmul.f32 %v175, %v536
  %v539 = vmul.f32 %v176, %v536
  %v540 = vmul.f32 %v177, %v536
  %v542 = vsel %vm76, %v537, 0
  %v545 = vsel %vm76, %v538, 0
  %v548 = vsel %vm76, %v539, 0
  %v551 = vsel %vm76, %v540, 0
  %553 = vmatprep.subr.mxu0 0.0
  %554 = vmatpush1.xpose.msra.mxu0 %v388
  %555 = vmatprep.subr.mxu0 0.0
  %556 = vmatpush1.xpose.msra.mxu0 %v391
  %557 = vmatprep.subr.mxu0 0.0
  %558 = vmatpush1.xpose.msra.mxu0 %v394
  %559 = vmatprep.subr.mxu0 0.0
  %560 = vmatpush1.xpose.msra.mxu0 %v397
  %561 = vmatprep.subr.mxu0 0.0
  %562 = vmatpush1.xpose.msra.mxu0 0.0
  %563 = vmatprep.subr.mxu0 0.0
  %564 = vmatpush1.xpose.msra.mxu0 0.0
  %565 = vmatprep.subr.mxu0 0.0
  %566 = vmatpush1.xpose.msra.mxu0 0.0
  %567 = vmatprep.subr.mxu0 0.0
  %568 = vmatpush1.xpose.msra.mxu0 0.0
  %569 = vmatprep.subr.mxu0 0.0
  %570 = vmatpush1.xpose.msra.mxu0 0.0
  %571 = vmatprep.subr.mxu0 0.0
  %572 = vmatpush1.xpose.msra.mxu0 0.0
  %573 = vmatprep.subr.mxu0 0.0
  %574 = vmatpush1.xpose.msra.mxu0 0.0
  %575 = vmatprep.subr.mxu0 0.0
  %576 = vmatpush1.xpose.msra.mxu0 0.0
  %577 = vmatprep.subr.mxu0 0.0
  %578 = vmatpush1.xpose.msra.mxu0 0.0
  %579 = vmatprep.subr.mxu0 0.0
  %580 = vmatpush1.xpose.msra.mxu0 0.0
  %581 = vmatprep.subr.mxu0 0.0
  %582 = vmatpush1.xpose.msra.mxu0 0.0
  %583 = vmatprep.subr.mxu0 0.0
  %584 = vmatpush1.xpose.msra.mxu0 0.0
  %585 = vmatprep.subr.mxu0 0.0
  %586 = vmatpush1.xpose.msra.mxu0 0.0
  %587 = vmatprep.subr.mxu0 0.0
  %588 = vmatpush1.xpose.msra.mxu0 0.0
  %589 = vmatprep.subr.mxu0 0.0
  %590 = vmatpush1.xpose.msra.mxu0 0.0
  %591 = vmatprep.subr.mxu0 0.0
  %592 = vmatpush1.xpose.msra.mxu0 0.0
  %593 = vmatprep.subr.mxu0 0.0
  %594 = vmatpush1.xpose.msra.mxu0 0.0
  %595 = vmatprep.subr.mxu0 0.0
  %596 = vmatpush1.xpose.msra.mxu0 0.0
  %597 = vmatprep.subr.mxu0 0.0
  %598 = vmatpush1.xpose.msra.mxu0 0.0
  %599 = vmatprep.subr.mxu0 0.0
  %600 = vmatpush1.xpose.msra.mxu0 0.0
  %601 = vmatprep.subr.mxu0 0.0
  %602 = vmatpush1.xpose.msra.mxu0 0.0
  %603 = vmatprep.subr.mxu0 0.0
  %604 = vmatpush1.xpose.msra.mxu0 0.0
  %605 = vmatprep.subr.mxu0 0.0
  %606 = vmatpush1.xpose.msra.mxu0 0.0
  %607 = vmatprep.subr.mxu0 0.0
  %608 = vmatpush1.xpose.msra.mxu0 0.0
  %609 = vmatprep.subr.mxu0 0.0
  %610 = vmatpush1.xpose.msra.mxu0 0.0
  %611 = vmatprep.subr.mxu0 0.0
  %612 = vmatpush1.xpose.msra.mxu0 0.0
  %613 = vmatprep.subr.mxu0 0.0
  %614 = vmatpush1.xpose.msra.mxu0 0.0
  %615 = vmatprep.subr.mxu0 0.0
  %616 = vmatpush1.xpose.msra.mxu0 0.0
  %617 = vmatprep.mubr.f32.mxu0 0.0
  %618 = vmatmul.mubr.f32.gmra.mrb[0].mxu0 %v542
  %v619 = vpop.f32.mrb[0].mxu0
  %v620 = vadd.f32 %v63, %v619
  %v621 = vpop.f32.mrb[0].mxu0
  %622 = vmatprep.mubr.f32.mxu0 0.0
  %623 = vmatmul.mubr.f32.gmra.mrb[0].mxu0 %v545
  %v624 = vpop.f32.mrb[0].mxu0
  %v625 = vadd.f32 %v64, %v624
  %v626 = vpop.f32.mrb[0].mxu0
  %627 = vmatprep.mubr.f32.mxu0 0.0
  %628 = vmatmul.mubr.f32.gmra.mrb[0].mxu0 %v548
  %v629 = vpop.f32.mrb[0].mxu0
  %v630 = vadd.f32 %v65, %v629
  %v631 = vpop.f32.mrb[0].mxu0
  %632 = vmatprep.mubr.f32.mxu0 0.0
  %633 = vmatmul.mubr.f32.gmra.mrb[0].mxu0 %v551
  %v634 = vpop.f32.mrb[0].mxu0
  %v635 = vadd.f32 %v66, %v634
  %v636 = vpop.f32.mrb[0].mxu0
  %637 = vdwg.mxu0
  %v638 = vsel %vm76, %v620, -inf
  %639 = vmax.xlane.f32.xlu0 %v638
  %v640 = vpop.xlane.xlu0 %639
  %v641 = vsel %vm76, %v625, -inf
  %642 = vmax.xlane.f32.xlu0 %v641
  %v643 = vpop.xlane.xlu0 %642
  %v644 = vsel %vm76, %v630, -inf
  %645 = vmax.xlane.f32.xlu0 %v644
  %v646 = vpop.xlane.xlu0 %645
  %v647 = vsel %vm76, %v635, -inf
  %648 = vmax.xlane.f32.xlu0 %v647
  %v649 = vpop.xlane.xlu0 %648
  %v650 = vsub.f32 %v620, %v640
  %v651 = vsub.f32 %v625, %v643
  %v652 = vsub.f32 %v630, %v646
  %v653 = vsub.f32 %v635, %v649
  %v654 = vmul.f32 %v650, 1.442695
  %v655 = vpow.pop %v654
  %v656 = vmul.f32 %v651, 1.442695
  %v657 = vpow.pop %v656
  %v658 = vmul.f32 %v652, 1.442695
  %v659 = vpow.pop %v658
  %v660 = vmul.f32 %v653, 1.442695
  %v661 = vpow.pop %v660
  %v662 = vsel %vm76, %v655, 0.0
  %663 = vadd.xlane.f32.xlu0 %v662
  %v664 = vpop.xlane.xlu0 %663
  %v665 = vsel %vm76, %v657, 0.0
  %666 = vadd.xlane.f32.xlu0 %v665
  %v667 = vpop.xlane.xlu0 %666
  %v668 = vsel %vm76, %v659, 0.0
  %669 = vadd.xlane.f32.xlu0 %v668
  %v670 = vpop.xlane.xlu0 %669
  %v671 = vsel %vm76, %v661, 0.0
  %672 = vadd.xlane.f32.xlu0 %v671
  %v673 = vpop.xlane.xlu0 %672
  %v674 = vrcp.pop %v664
  %v675 = vrcp.pop %v667
  %v676 = vrcp.pop %v670
  %v677 = vrcp.pop %v673
  %v678 = vmul.f32 %v655, %v674
  %v679 = vmul.f32 %v657, %v675
  %v680 = vmul.f32 %v659, %v676
  %v681 = vmul.f32 %v661, %v677
  %v682 = vmul.f32 %v348, %v536
  %v683 = vmul.f32 %v353, %v536
  %v684 = vmul.f32 %v358, %v536
  %v685 = vmul.f32 %v363, %v536
  %v687 = vsel %vm76, %v678, 0
  %v690 = vsel %vm76, %v679, 0
  %v693 = vsel %vm76, %v680, 0
  %v696 = vsel %vm76, %v681, 0
  %698 = vmatprep.subr.mxu0 0.0
  %699 = vmatpush1.msra.mxu0 %v682
  %700 = vmatprep.subr.mxu0 0.0
  %701 = vmatpush1.msra.mxu0 %v683
  %702 = vmatprep.subr.mxu0 0.0
  %703 = vmatpush1.msra.mxu0 %v684
  %704 = vmatprep.subr.mxu0 0.0
  %705 = vmatpush1.msra.mxu0 %v685
  %706 = vmatprep.subr.mxu0 0.0
  %707 = vmatpush1.msra.mxu0 0.0
  %708 = vmatprep.subr.mxu0 0.0
  %709 = vmatpush1.msra.mxu0 0.0
  %710 = vmatprep.subr.mxu0 0.0
  %711 = vmatpush1.msra.mxu0 0.0
  %712 = vmatprep.subr.mxu0 0.0
  %713 = vmatpush1.msra.mxu0 0.0
  %714 = vmatprep.subr.mxu0 0.0
  %715 = vmatpush1.msra.mxu0 0.0
  %716 = vmatprep.subr.mxu0 0.0
  %717 = vmatpush1.msra.mxu0 0.0
  %718 = vmatprep.subr.mxu0 0.0
  %719 = vmatpush1.msra.mxu0 0.0
  %720 = vmatprep.subr.mxu0 0.0
  %721 = vmatpush1.msra.mxu0 0.0
  %722 = vmatprep.subr.mxu0 0.0
  %723 = vmatpush1.msra.mxu0 0.0
  %724 = vmatprep.subr.mxu0 0.0
  %725 = vmatpush1.msra.mxu0 0.0
  %726 = vmatprep.subr.mxu0 0.0
  %727 = vmatpush1.msra.mxu0 0.0
  %728 = vmatprep.subr.mxu0 0.0
  %729 = vmatpush1.msra.mxu0 0.0
  %730 = vmatprep.subr.mxu0 0.0
  %731 = vmatpush1.msra.mxu0 0.0
  %732 = vmatprep.subr.mxu0 0.0
  %733 = vmatpush1.msra.mxu0 0.0
  %734 = vmatprep.subr.mxu0 0.0
  %735 = vmatpush1.msra.mxu0 0.0
  %736 = vmatprep.subr.mxu0 0.0
  %737 = vmatpush1.msra.mxu0 0.0
  %738 = vmatprep.subr.mxu0 0.0
  %739 = vmatpush1.msra.mxu0 0.0
  %740 = vmatprep.subr.mxu0 0.0
  %741 = vmatpush1.msra.mxu0 0.0
  %742 = vmatprep.subr.mxu0 0.0
  %743 = vmatpush1.msra.mxu0 0.0
  %744 = vmatprep.subr.mxu0 0.0
  %745 = vmatpush1.msra.mxu0 0.0
  %746 = vmatprep.subr.mxu0 0.0
  %747 = vmatpush1.msra.mxu0 0.0
  %748 = vmatprep.subr.mxu0 0.0
  %749 = vmatpush1.msra.mxu0 0.0
  %750 = vmatprep.subr.mxu0 0.0
  %751 = vmatpush1.msra.mxu0 0.0
  %752 = vmatprep.subr.mxu0 0.0
  %753 = vmatpush1.msra.mxu0 0.0
  %754 = vmatprep.subr.mxu0 0.0
  %755 = vmatpush1.msra.mxu0 0.0
  %756 = vmatprep.subr.mxu0 0.0
  %757 = vmatpush1.msra.mxu0 0.0
  %758 = vmatprep.subr.mxu0 0.0
  %759 = vmatpush1.msra.mxu0 0.0
  %760 = vmatprep.subr.mxu0 0.0
  %761 = vmatpush1.msra.mxu0 0.0
  %762 = vmatprep.mubr.f32.mxu0 0.0
  %763 = vmatmul.mubr.f32.gmra.mrb[0].mxu0 %v687
  %v764 = vpop.f32.mrb[0].mxu0
  %v765 = vadd.f32 0.0, %v764
  %v766 = vpop.f32.mrb[0].mxu0
  %767 = vmatprep.mubr.f32.mxu0 0.0
  %768 = vmatmul.mubr.f32.gmra.mrb[0].mxu0 %v690
  %v769 = vpop.f32.mrb[0].mxu0
  %v770 = vadd.f32 0.0, %v769
  %v771 = vpop.f32.mrb[0].mxu0
  %772 = vmatprep.mubr.f32.mxu0 0.0
  %773 = vmatmul.mubr.f32.gmra.mrb[0].mxu0 %v693
  %v774 = vpop.f32.mrb[0].mxu0
  %v775 = vadd.f32 0.0, %v774
  %v776 = vpop.f32.mrb[0].mxu0
  %777 = vmatprep.mubr.f32.mxu0 0.0
  %778 = vmatmul.mubr.f32.gmra.mrb[0].mxu0 %v696
  %v779 = vpop.f32.mrb[0].mxu0
  %v780 = vadd.f32 0.0, %v779
  %v781 = vpop.f32.mrb[0].mxu0
  %782 = vdwg.mxu0
  %v784 = vsel %vm76, %v524, 0
  %v787 = vsel %vm76, %v525, 0
  %v790 = vsel %vm76, %v526, 0
  %v793 = vsel %vm76, %v527, 0
  %795 = vmatprep.subr.mxu0 0.0
  %796 = vmatpush1.msra.mxu0 %v528
  %797 = vmatprep.subr.mxu0 0.0
  %798 = vmatpush1.msra.mxu0 %v529
  %799 = vmatprep.subr.mxu0 0.0
  %800 = vmatpush1.msra.mxu0 %v530
  %801 = vmatprep.subr.mxu0 0.0
  %802 = vmatpush1.msra.mxu0 %v531
  %803 = vmatprep.subr.mxu0 0.0
  %804 = vmatpush1.msra.mxu0 0.0
  %805 = vmatprep.subr.mxu0 0.0
  %806 = vmatpush1.msra.mxu0 0.0
  %807 = vmatprep.subr.mxu0 0.0
  %808 = vmatpush1.msra.mxu0 0.0
  %809 = vmatprep.subr.mxu0 0.0
  %810 = vmatpush1.msra.mxu0 0.0
  %811 = vmatprep.subr.mxu0 0.0
  %812 = vmatpush1.msra.mxu0 0.0
  %813 = vmatprep.subr.mxu0 0.0
  %814 = vmatpush1.msra.mxu0 0.0
  %815 = vmatprep.subr.mxu0 0.0
  %816 = vmatpush1.msra.mxu0 0.0
  %817 = vmatprep.subr.mxu0 0.0
  %818 = vmatpush1.msra.mxu0 0.0
  %819 = vmatprep.subr.mxu0 0.0
  %820 = vmatpush1.msra.mxu0 0.0
  %821 = vmatprep.subr.mxu0 0.0
  %822 = vmatpush1.msra.mxu0 0.0
  %823 = vmatprep.subr.mxu0 0.0
  %824 = vmatpush1.msra.mxu0 0.0
  %825 = vmatprep.subr.mxu0 0.0
  %826 = vmatpush1.msra.mxu0 0.0
  %827 = vmatprep.subr.mxu0 0.0
  %828 = vmatpush1.msra.mxu0 0.0
  %829 = vmatprep.subr.mxu0 0.0
  %830 = vmatpush1.msra.mxu0 0.0
  %831 = vmatprep.subr.mxu0 0.0
  %832 = vmatpush1.msra.mxu0 0.0
  %833 = vmatprep.subr.mxu0 0.0
  %834 = vmatpush1.msra.mxu0 0.0
  %835 = vmatprep.subr.mxu0 0.0
  %836 = vmatpush1.msra.mxu0 0.0
  %837 = vmatprep.subr.mxu0 0.0
  %838 = vmatpush1.msra.mxu0 0.0
  %839 = vmatprep.subr.mxu0 0.0
  %840 = vmatpush1.msra.mxu0 0.0
  %841 = vmatprep.subr.mxu0 0.0
  %842 = vmatpush1.msra.mxu0 0.0
  %843 = vmatprep.subr.mxu0 0.0
  %844 = vmatpush1.msra.mxu0 0.0
  %845 = vmatprep.subr.mxu0 0.0
  %846 = vmatpush1.msra.mxu0 0.0
  %847 = vmatprep.subr.mxu0 0.0
  %848 = vmatpush1.msra.mxu0 0.0
  %849 = vmatprep.subr.mxu0 0.0
  %850 = vmatpush1.msra.mxu0 0.0
  %851 = vmatprep.subr.mxu0 0.0
  %852 = vmatpush1.msra.mxu0 0.0
  %853 = vmatprep.subr.mxu0 0.0
  %854 = vmatpush1.msra.mxu0 0.0
  %855 = vmatprep.subr.mxu0 0.0
  %856 = vmatpush1.msra.mxu0 0.0
  %857 = vmatprep.subr.mxu0 0.0
  %858 = vmatpush1.msra.mxu0 0.0
  %859 = vmatprep.mubr.f32.mxu0 0.0
  %860 = vmatmul.mubr.f32.gmra.mrb[0].mxu0 %v784
  %v861 = vpop.f32.mrb[0].mxu0
  %v862 = vadd.f32 %v765, %v861
  %v863 = vpop.f32.mrb[0].mxu0
  %864 = vmatprep.mubr.f32.mxu0 0.0
  %865 = vmatmul.mubr.f32.gmra.mrb[0].mxu0 %v787
  %v866 = vpop.f32.mrb[0].mxu0
  %v867 = vadd.f32 %v770, %v866
  %v868 = vpop.f32.mrb[0].mxu0
  %869 = vmatprep.mubr.f32.mxu0 0.0
  %870 = vmatmul.mubr.f32.gmra.mrb[0].mxu0 %v790
  %v871 = vpop.f32.mrb[0].mxu0
  %v872 = vadd.f32 %v775, %v871
  %v873 = vpop.f32.mrb[0].mxu0
  %874 = vmatprep.mubr.f32.mxu0 0.0
  %875 = vmatmul.mubr.f32.gmra.mrb[0].mxu0 %v793
  %v876 = vpop.f32.mrb[0].mxu0
  %v877 = vadd.f32 %v780, %v876
  %v878 = vpop.f32.mrb[0].mxu0
  %879 = vdwg.mxu0
  %v880 = vld [vmem:[%s5 + $0xd] sm:$0x1]
  %v881 = vlaneseq
  %v882 = vshrl.u32 %v881, 7
  %v883 = vsub.s32 0, %v882
  %v884 = vrot.slane %v880, %v883
  %v885 = vmul.f32 %v174, %v884
  %v886 = vmul.f32 %v175, %v884
  %v887 = vmul.f32 %v176, %v884
  %v888 = vmul.f32 %v177, %v884
  %v890 = vsel %vm76, %v885, 0
  %v893 = vsel %vm76, %v886, 0
  %v896 = vsel %vm76, %v887, 0
  %v899 = vsel %vm76, %v888, 0
  %901 = vmatprep.subr.mxu0 0.0
  %902 = vmatpush1.xpose.msra.mxu0 %v388
  %903 = vmatprep.subr.mxu0 0.0
  %904 = vmatpush1.xpose.msra.mxu0 %v391
  %905 = vmatprep.subr.mxu0 0.0
  %906 = vmatpush1.xpose.msra.mxu0 %v394
  %907 = vmatprep.subr.mxu0 0.0
  %908 = vmatpush1.xpose.msra.mxu0 %v397
  %909 = vmatprep.subr.mxu0 0.0
  %910 = vmatpush1.xpose.msra.mxu0 0.0
  %911 = vmatprep.subr.mxu0 0.0
  %912 = vmatpush1.xpose.msra.mxu0 0.0
  %913 = vmatprep.subr.mxu0 0.0
  %914 = vmatpush1.xpose.msra.mxu0 0.0
  %915 = vmatprep.subr.mxu0 0.0
  %916 = vmatpush1.xpose.msra.mxu0 0.0
  %917 = vmatprep.subr.mxu0 0.0
  %918 = vmatpush1.xpose.msra.mxu0 0.0
  %919 = vmatprep.subr.mxu0 0.0
  %920 = vmatpush1.xpose.msra.mxu0 0.0
  %921 = vmatprep.subr.mxu0 0.0
  %922 = vmatpush1.xpose.msra.mxu0 0.0
  %923 = vmatprep.subr.mxu0 0.0
  %924 = vmatpush1.xpose.msra.mxu0 0.0
  %925 = vmatprep.subr.mxu0 0.0
  %926 = vmatpush1.xpose.msra.mxu0 0.0
  %927 = vmatprep.subr.mxu0 0.0
  %928 = vmatpush1.xpose.msra.mxu0 0.0
  %929 = vmatprep.subr.mxu0 0.0
  %930 = vmatpush1.xpose.msra.mxu0 0.0
  %931 = vmatprep.subr.mxu0 0.0
  %932 = vmatpush1.xpose.msra.mxu0 0.0
  %933 = vmatprep.subr.mxu0 0.0
  %934 = vmatpush1.xpose.msra.mxu0 0.0
  %935 = vmatprep.subr.mxu0 0.0
  %936 = vmatpush1.xpose.msra.mxu0 0.0
  %937 = vmatprep.subr.mxu0 0.0
  %938 = vmatpush1.xpose.msra.mxu0 0.0
  %939 = vmatprep.subr.mxu0 0.0
  %940 = vmatpush1.xpose.msra.mxu0 0.0
  %941 = vmatprep.subr.mxu0 0.0
  %942 = vmatpush1.xpose.msra.mxu0 0.0
  %943 = vmatprep.subr.mxu0 0.0
  %944 = vmatpush1.xpose.msra.mxu0 0.0
  %945 = vmatprep.subr.mxu0 0.0
  %946 = vmatpush1.xpose.msra.mxu0 0.0
  %947 = vmatprep.subr.mxu0 0.0
  %948 = vmatpush1.xpose.msra.mxu0 0.0
  %949 = vmatprep.subr.mxu0 0.0
  %950 = vmatpush1.xpose.msra.mxu0 0.0
  %951 = vmatprep.subr.mxu0 0.0
  %952 = vmatpush1.xpose.msra.mxu0 0.0
  %953 = vmatprep.subr.mxu0 0.0
  %954 = vmatpush1.xpose.msra.mxu0 0.0
  %955 = vmatprep.subr.mxu0 0.0
  %956 = vmatpush1.xpose.msra.mxu0 0.0
  %957 = vmatprep.subr.mxu0 0.0
  %958 = vmatpush1.xpose.msra.mxu0 0.0
  %959 = vmatprep.subr.mxu0 0.0
  %960 = vmatpush1.xpose.msra.mxu0 0.0
  %961 = vmatprep.subr.mxu0 0.0
  %962 = vmatpush1.xpose.msra.mxu0 0.0
  %963 = vmatprep.subr.mxu0 0.0
  %964 = vmatpush1.xpose.msra.mxu0 0.0
  %965 = vmatprep.mubr.f32.mxu0 0.0
  %966 = vmatmul.mubr.f32.gmra.mrb[0].mxu0 %v890
  %v967 = vpop.f32.mrb[0].mxu0
  %v968 = vadd.f32 %v63, %v967
  %v969 = vpop.f32.mrb[0].mxu0
  %970 = vmatprep.mubr.f32.mxu0 0.0
  %971 = vmatmul.mubr.f32.gmra.mrb[0].mxu0 %v893
  %v972 = vpop.f32.mrb[0].mxu0
  %v973 = vadd.f32 %v64, %v972
  %v974 = vpop.f32.mrb[0].mxu0
  %975 = vmatprep.mubr.f32.mxu0 0.0
  %976 = vmatmul.mubr.f32.gmra.mrb[0].mxu0 %v896
  %v977 = vpop.f32.mrb[0].mxu0
  %v978 = vadd.f32 %v65, %v977
  %v979 = vpop.f32.mrb[0].mxu0
  %980 = vmatprep.mubr.f32.mxu0 0.0
  %981 = vmatmul.mubr.f32.gmra.mrb[0].mxu0 %v899
  %v982 = vpop.f32.mrb[0].mxu0
  %v983 = vadd.f32 %v66, %v982
  %v984 = vpop.f32.mrb[0].mxu0
  %985 = vdwg.mxu0
  %v986 = vsel %vm76, %v968, -inf
  %987 = vmax.xlane.f32.xlu0 %v986
  %v988 = vpop.xlane.xlu0 %987
  %v989 = vsel %vm76, %v973, -inf
  %990 = vmax.xlane.f32.xlu0 %v989
  %v991 = vpop.xlane.xlu0 %990
  %v992 = vsel %vm76, %v978, -inf
  %993 = vmax.xlane.f32.xlu0 %v992
  %v994 = vpop.xlane.xlu0 %993
  %v995 = vsel %vm76, %v983, -inf
  %996 = vmax.xlane.f32.xlu0 %v995
  %v997 = vpop.xlane.xlu0 %996
  %v998 = vsub.f32 %v968, %v988
  %v999 = vsub.f32 %v973, %v991
  %v1000 = vsub.f32 %v978, %v994
  %v1001 = vsub.f32 %v983, %v997
  %v1002 = vmul.f32 %v998, 1.442695
  %v1003 = vpow.pop %v1002
  %v1004 = vmul.f32 %v999, 1.442695
  %v1005 = vpow.pop %v1004
  %v1006 = vmul.f32 %v1000, 1.442695
  %v1007 = vpow.pop %v1006
  %v1008 = vmul.f32 %v1001, 1.442695
  %v1009 = vpow.pop %v1008
  %v1010 = vsel %vm76, %v1003, 0.0
  %1011 = vadd.xlane.f32.xlu0 %v1010
  %v1012 = vpop.xlane.xlu0 %1011
  %v1013 = vsel %vm76, %v1005, 0.0
  %1014 = vadd.xlane.f32.xlu0 %v1013
  %v1015 = vpop.xlane.xlu0 %1014
  %v1016 = vsel %vm76, %v1007, 0.0
  %1017 = vadd.xlane.f32.xlu0 %v1016
  %v1018 = vpop.xlane.xlu0 %1017
  %v1019 = vsel %vm76, %v1009, 0.0
  %1020 = vadd.xlane.f32.xlu0 %v1019
  %v1021 = vpop.xlane.xlu0 %1020
  %v1022 = vrcp.pop %v1012
  %v1023 = vrcp.pop %v1015
  %v1024 = vrcp.pop %v1018
  %v1025 = vrcp.pop %v1021
  %v1026 = vmul.f32 %v1003, %v1022
  %v1027 = vmul.f32 %v1005, %v1023
  %v1028 = vmul.f32 %v1007, %v1024
  %v1029 = vmul.f32 %v1009, %v1025
  %v1030 = vmul.f32 %v348, %v884
  %v1031 = vmul.f32 %v353, %v884
  %v1032 = vmul.f32 %v358, %v884
  %v1033 = vmul.f32 %v363, %v884
  %v1035 = vsel %vm76, %v1026, 0
  %v1038 = vsel %vm76, %v1027, 0
  %v1041 = vsel %vm76, %v1028, 0
  %v1044 = vsel %vm76, %v1029, 0
  %1046 = vmatprep.subr.mxu0 0.0
  %1047 = vmatpush1.msra.mxu0 %v1030
  %1048 = vmatprep.subr.mxu0 0.0
  %1049 = vmatpush1.msra.mxu0 %v1031
  %1050 = vmatprep.subr.mxu0 0.0
  %1051 = vmatpush1.msra.mxu0 %v1032
  %1052 = vmatprep.subr.mxu0 0.0
  %1053 = vmatpush1.msra.mxu0 %v1033
  %1054 = vmatprep.subr.mxu0 0.0
  %1055 = vmatpush1.msra.mxu0 0.0
  %1056 = vmatprep.subr.mxu0 0.0
  %1057 = vmatpush1.msra.mxu0 0.0
  %1058 = vmatprep.subr.mxu0 0.0
  %1059 = vmatpush1.msra.mxu0 0.0
  %1060 = vmatprep.subr.mxu0 0.0
  %1061 = vmatpush1.msra.mxu0 0.0
  %1062 = vmatprep.subr.mxu0 0.0
  %1063 = vmatpush1.msra.mxu0 0.0
  %1064 = vmatprep.subr.mxu0 0.0
  %1065 = vmatpush1.msra.mxu0 0.0
  %1066 = vmatprep.subr.mxu0 0.0
  %1067 = vmatpush1.msra.mxu0 0.0
  %1068 = vmatprep.subr.mxu0 0.0
  %1069 = vmatpush1.msra.mxu0 0.0
  %1070 = vmatprep.subr.mxu0 0.0
  %1071 = vmatpush1.msra.mxu0 0.0
  %1072 = vmatprep.subr.mxu0 0.0
  %1073 = vmatpush1.msra.mxu0 0.0
  %1074 = vmatprep.subr.mxu0 0.0
  %1075 = vmatpush1.msra.mxu0 0.0
  %1076 = vmatprep.subr.mxu0 0.0
  %1077 = vmatpush1.msra.mxu0 0.0
  %1078 = vmatprep.subr.mxu0 0.0
  %1079 = vmatpush1.msra.mxu0 0.0
  %1080 = vmatprep.subr.mxu0 0.0
  %1081 = vmatpush1.msra.mxu0 0.0
  %1082 = vmatprep.subr.mxu0 0.0
  %1083 = vmatpush1.msra.mxu0 0.0
  %1084 = vmatprep.subr.mxu0 0.0
  %1085 = vmatpush1.msra.mxu0 0.0
  %1086 = vmatprep.subr.mxu0 0.0
  %1087 = vmatpush1.msra.mxu0 0.0
  %1088 = vmatprep.subr.mxu0 0.0
  %1089 = vmatpush1.msra.mxu0 0.0
  %1090 = vmatprep.subr.mxu0 0.0
  %1091 = vmatpush1.msra.mxu0 0.0
  %1092 = vmatprep.subr.mxu0 0.0
  %1093 = vmatpush1.msra.mxu0 0.0
  %1094 = vmatprep.subr.mxu0 0.0
  %1095 = vmatpush1.msra.mxu0 0.0
  %1096 = vmatprep.subr.mxu0 0.0
  %1097 = vmatpush1.msra.mxu0 0.0
  %1098 = vmatprep.subr.mxu0 0.0
  %1099 = vmatpush1.msra.mxu0 0.0
  %1100 = vmatprep.subr.mxu0 0.0
  %1101 = vmatpush1.msra.mxu0 0.0
  %1102 = vmatprep.subr.mxu0 0.0
  %1103 = vmatpush1.msra.mxu0 0.0
  %1104 = vmatprep.subr.mxu0 0.0
  %1105 = vmatpush1.msra.mxu0 0.0
  %1106 = vmatprep.subr.mxu0 0.0
  %1107 = vmatpush1.msra.mxu0 0.0
  %1108 = vmatprep.subr.mxu0 0.0
  %1109 = vmatpush1.msra.mxu0 0.0
  %1110 = vmatprep.mubr.f32.mxu0 0.0
  %1111 = vmatmul.mubr.f32.gmra.mrb[0].mxu0 %v1035
  %v1112 = vpop.f32.mrb[0].mxu0
  %v1113 = vadd.f32 0.0, %v1112
  %v1114 = vpop.f32.mrb[0].mxu0
  %1115 = vmatprep.mubr.f32.mxu0 0.0
  %1116 = vmatmul.mubr.f32.gmra.mrb[0].mxu0 %v1038
  %v1117 = vpop.f32.mrb[0].mxu0
  %v1118 = vadd.f32 0.0, %v1117
  %v1119 = vpop.f32.mrb[0].mxu0
  %1120 = vmatprep.mubr.f32.mxu0 0.0
  %1121 = vmatmul.mubr.f32.gmra.mrb[0].mxu0 %v1041
  %v1122 = vpop.f32.mrb[0].mxu0
  %v1123 = vadd.f32 0.0, %v1122
  %v1124 = vpop.f32.mrb[0].mxu0
  %1125 = vmatprep.mubr.f32.mxu0 0.0
  %1126 = vmatmul.mubr.f32.gmra.mrb[0].mxu0 %v1044
  %v1127 = vpop.f32.mrb[0].mxu0
  %v1128 = vadd.f32 0.0, %v1127
  %v1129 = vpop.f32.mrb[0].mxu0
  %1130 = vdwg.mxu0
  %v1131 = vadd.f32 %v862, %v1113
  %v1132 = vadd.f32 %v867, %v1118
  %v1133 = vadd.f32 %v872, %v1123
  %v1134 = vadd.f32 %v877, %v1128
  %v1135 = vld [vmem:[%s5 + $0xe] sm:$0x1]
  %v1136 = vlaneseq
  %v1137 = vshrl.u32 %v1136, 7
  %v1138 = vsub.s32 0, %v1137
  %v1139 = vrot.slane %v1135, %v1138
  %v1140 = vmul.f32 %v174, %v1139
  %v1141 = vmul.f32 %v175, %v1139
  %v1142 = vmul.f32 %v176, %v1139
  %v1143 = vmul.f32 %v177, %v1139
  %v1145 = vsel %vm76, %v1140, 0
  %v1148 = vsel %vm76, %v1141, 0
  %v1151 = vsel %vm76, %v1142, 0
  %v1154 = vsel %vm76, %v1143, 0
  %1156 = vmatprep.subr.mxu0 0.0
  %1157 = vmatpush1.xpose.msra.mxu0 %v388
  %1158 = vmatprep.subr.mxu0 0.0
  %1159 = vmatpush1.xpose.msra.mxu0 %v391
  %1160 = vmatprep.subr.mxu0 0.0
  %1161 = vmatpush1.xpose.msra.mxu0 %v394
  %1162 = vmatprep.subr.mxu0 0.0
  %1163 = vmatpush1.xpose.msra.mxu0 %v397
  %1164 = vmatprep.subr.mxu0 0.0
  %1165 = vmatpush1.xpose.msra.mxu0 0.0
  %1166 = vmatprep.subr.mxu0 0.0
  %1167 = vmatpush1.xpose.msra.mxu0 0.0
  %1168 = vmatprep.subr.mxu0 0.0
  %1169 = vmatpush1.xpose.msra.mxu0 0.0
  %1170 = vmatprep.subr.mxu0 0.0
  %1171 = vmatpush1.xpose.msra.mxu0 0.0
  %1172 = vmatprep.subr.mxu0 0.0
  %1173 = vmatpush1.xpose.msra.mxu0 0.0
  %1174 = vmatprep.subr.mxu0 0.0
  %1175 = vmatpush1.xpose.msra.mxu0 0.0
  %1176 = vmatprep.subr.mxu0 0.0
  %1177 = vmatpush1.xpose.msra.mxu0 0.0
  %1178 = vmatprep.subr.mxu0 0.0
  %1179 = vmatpush1.xpose.msra.mxu0 0.0
  %1180 = vmatprep.subr.mxu0 0.0
  %1181 = vmatpush1.xpose.msra.mxu0 0.0
  %1182 = vmatprep.subr.mxu0 0.0
  %1183 = vmatpush1.xpose.msra.mxu0 0.0
  %1184 = vmatprep.subr.mxu0 0.0
  %1185 = vmatpush1.xpose.msra.mxu0 0.0
  %1186 = vmatprep.subr.mxu0 0.0
  %1187 = vmatpush1.xpose.msra.mxu0 0.0
  %1188 = vmatprep.subr.mxu0 0.0
  %1189 = vmatpush1.xpose.msra.mxu0 0.0
  %1190 = vmatprep.subr.mxu0 0.0
  %1191 = vmatpush1.xpose.msra.mxu0 0.0
  %1192 = vmatprep.subr.mxu0 0.0
  %1193 = vmatpush1.xpose.msra.mxu0 0.0
  %1194 = vmatprep.subr.mxu0 0.0
  %1195 = vmatpush1.xpose.msra.mxu0 0.0
  %1196 = vmatprep.subr.mxu0 0.0
  %1197 = vmatpush1.xpose.msra.mxu0 0.0
  %1198 = vmatprep.subr.mxu0 0.0
  %1199 = vmatpush1.xpose.msra.mxu0 0.0
  %1200 = vmatprep.subr.mxu0 0.0
  %1201 = vmatpush1.xpose.msra.mxu0 0.0
  %1202 = vmatprep.subr.mxu0 0.0
  %1203 = vmatpush1.xpose.msra.mxu0 0.0
  %1204 = vmatprep.subr.mxu0 0.0
  %1205 = vmatpush1.xpose.msra.mxu0 0.0
  %1206 = vmatprep.subr.mxu0 0.0
  %1207 = vmatpush1.xpose.msra.mxu0 0.0
  %1208 = vmatprep.subr.mxu0 0.0
  %1209 = vmatpush1.xpose.msra.mxu0 0.0
  %1210 = vmatprep.subr.mxu0 0.0
  %1211 = vmatpush1.xpose.msra.mxu0 0.0
  %1212 = vmatprep.subr.mxu0 0.0
  %1213 = vmatpush1.xpose.msra.mxu0 0.0
  %1214 = vmatprep.subr.mxu0 0.0
  %1215 = vmatpush1.xpose.msra.mxu0 0.0
  %1216 = vmatprep.subr.mxu0 0.0
  %1217 = vmatpush1.xpose.msra.mxu0 0.0
  %1218 = vmatprep.subr.mxu0 0.0
  %1219 = vmatpush1.xpose.msra.mxu0 0.0
  %1220 = vmatprep.mubr.f32.mxu0 0.0
  %1221 = vmatmul.mubr.f32.gmra.mrb[0].mxu0 %v1145
  %v1222 = vpop.f32.mrb[0].mxu0
  %v1223 = vadd.f32 %v63, %v1222
  %v1224 = vpop.f32.mrb[0].mxu0
  %1225 = vmatprep.mubr.f32.mxu0 0.0
  %1226 = vmatmul.mubr.f32.gmra.mrb[0].mxu0 %v1148
  %v1227 = vpop.f32.mrb[0].mxu0
  %v1228 = vadd.f32 %v64, %v1227
  %v1229 = vpop.f32.mrb[0].mxu0
  %1230 = vmatprep.mubr.f32.mxu0 0.0
  %1231 = vmatmul.mubr.f32.gmra.mrb[0].mxu0 %v1151
  %v1232 = vpop.f32.mrb[0].mxu0
  %v1233 = vadd.f32 %v65, %v1232
  %v1234 = vpop.f32.mrb[0].mxu0
  %1235 = vmatprep.mubr.f32.mxu0 0.0
  %1236 = vmatmul.mubr.f32.gmra.mrb[0].mxu0 %v1154
  %v1237 = vpop.f32.mrb[0].mxu0
  %v1238 = vadd.f32 %v66, %v1237
  %v1239 = vpop.f32.mrb[0].mxu0
  %1240 = vdwg.mxu0
  %v1241 = vsel %vm76, %v1223, -inf
  %1242 = vmax.xlane.f32.xlu0 %v1241
  %v1243 = vpop.xlane.xlu0 %1242
  %v1244 = vsel %vm76, %v1228, -inf
  %1245 = vmax.xlane.f32.xlu0 %v1244
  %v1246 = vpop.xlane.xlu0 %1245
  %v1247 = vsel %vm76, %v1233, -inf
  %1248 = vmax.xlane.f32.xlu0 %v1247
  %v1249 = vpop.xlane.xlu0 %1248
  %v1250 = vsel %vm76, %v1238, -inf
  %1251 = vmax.xlane.f32.xlu0 %v1250
  %v1252 = vpop.xlane.xlu0 %1251
  %v1253 = vsub.f32 %v1223, %v1243
  %v1254 = vsub.f32 %v1228, %v1246
  %v1255 = vsub.f32 %v1233, %v1249
  %v1256 = vsub.f32 %v1238, %v1252
  %v1257 = vmul.f32 %v1253, 1.442695
  %v1258 = vpow.pop %v1257
  %v1259 = vmul.f32 %v1254, 1.442695
  %v1260 = vpow.pop %v1259
  %v1261 = vmul.f32 %v1255, 1.442695
  %v1262 = vpow.pop %v1261
  %v1263 = vmul.f32 %v1256, 1.442695
  %v1264 = vpow.pop %v1263
  %v1265 = vsel %vm76, %v1258, 0.0
  %1266 = vadd.xlane.f32.xlu0 %v1265
  %v1267 = vpop.xlane.xlu0 %1266
  %v1268 = vsel %vm76, %v1260, 0.0
  %1269 = vadd.xlane.f32.xlu0 %v1268
  %v1270 = vpop.xlane.xlu0 %1269
  %v1271 = vsel %vm76, %v1262, 0.0
  %1272 = vadd.xlane.f32.xlu0 %v1271
  %v1273 = vpop.xlane.xlu0 %1272
  %v1274 = vsel %vm76, %v1264, 0.0
  %1275 = vadd.xlane.f32.xlu0 %v1274
  %v1276 = vpop.xlane.xlu0 %1275
  %v1277 = vrcp.pop %v1267
  %v1278 = vrcp.pop %v1270
  %v1279 = vrcp.pop %v1273
  %v1280 = vrcp.pop %v1276
  %v1281 = vmul.f32 %v1258, %v1277
  %v1282 = vmul.f32 %v1260, %v1278
  %v1283 = vmul.f32 %v1262, %v1279
  %v1284 = vmul.f32 %v1264, %v1280
  %v1285 = vmul.f32 %v348, %v1139
  %v1286 = vmul.f32 %v353, %v1139
  %v1287 = vmul.f32 %v358, %v1139
  %v1288 = vmul.f32 %v363, %v1139
  %v1290 = vsel %vm76, %v1281, 0
  %v1293 = vsel %vm76, %v1282, 0
  %v1296 = vsel %vm76, %v1283, 0
  %v1299 = vsel %vm76, %v1284, 0
  %1301 = vmatprep.subr.mxu0 0.0
  %1302 = vmatpush1.msra.mxu0 %v1285
  %1303 = vmatprep.subr.mxu0 0.0
  %1304 = vmatpush1.msra.mxu0 %v1286
  %1305 = vmatprep.subr.mxu0 0.0
  %1306 = vmatpush1.msra.mxu0 %v1287
  %1307 = vmatprep.subr.mxu0 0.0
  %1308 = vmatpush1.msra.mxu0 %v1288
  %1309 = vmatprep.subr.mxu0 0.0
  %1310 = vmatpush1.msra.mxu0 0.0
  %1311 = vmatprep.subr.mxu0 0.0
  %1312 = vmatpush1.msra.mxu0 0.0
  %1313 = vmatprep.subr.mxu0 0.0
  %1314 = vmatpush1.msra.mxu0 0.0
  %1315 = vmatprep.subr.mxu0 0.0
  %1316 = vmatpush1.msra.mxu0 0.0
  %1317 = vmatprep.subr.mxu0 0.0
  %1318 = vmatpush1.msra.mxu0 0.0
  %1319 = vmatprep.subr.mxu0 0.0
  %1320 = vmatpush1.msra.mxu0 0.0
  %1321 = vmatprep.subr.mxu0 0.0
  %1322 = vmatpush1.msra.mxu0 0.0
  %1323 = vmatprep.subr.mxu0 0.0
  %1324 = vmatpush1.msra.mxu0 0.0
  %1325 = vmatprep.subr.mxu0 0.0
  %1326 = vmatpush1.msra.mxu0 0.0
  %1327 = vmatprep.subr.mxu0 0.0
  %1328 = vmatpush1.msra.mxu0 0.0
  %1329 = vmatprep.subr.mxu0 0.0
  %1330 = vmatpush1.msra.mxu0 0.0
  %1331 = vmatprep.subr.mxu0 0.0
  %1332 = vmatpush1.msra.mxu0 0.0
  %1333 = vmatprep.subr.mxu0 0.0
  %1334 = vmatpush1.msra.mxu0 0.0
  %1335 = vmatprep.subr.mxu0 0.0
  %1336 = vmatpush1.msra.mxu0 0.0
  %1337 = vmatprep.subr.mxu0 0.0
  %1338 = vmatpush1.msra.mxu0 0.0
  %1339 = vmatprep.subr.mxu0 0.0
  %1340 = vmatpush1.msra.mxu0 0.0
  %1341 = vmatprep.subr.mxu0 0.0
  %1342 = vmatpush1.msra.mxu0 0.0
  %1343 = vmatprep.subr.mxu0 0.0
  %1344 = vmatpush1.msra.mxu0 0.0
  %1345 = vmatprep.subr.mxu0 0.0
  %1346 = vmatpush1.msra.mxu0 0.0
  %1347 = vmatprep.subr.mxu0 0.0
  %1348 = vmatpush1.msra.mxu0 0.0
  %1349 = vmatprep.subr.mxu0 0.0
  %1350 = vmatpush1.msra.mxu0 0.0
  %1351 = vmatprep.subr.mxu0 0.0
  %1352 = vmatpush1.msra.mxu0 0.0
  %1353 = vmatprep.subr.mxu0 0.0
  %1354 = vmatpush1.msra.mxu0 0.0
  %1355 = vmatprep.subr.mxu0 0.0
  %1356 = vmatpush1.msra.mxu0 0.0
  %1357 = vmatprep.subr.mxu0 0.0
  %1358 = vmatpush1.msra.mxu0 0.0
  %1359 = vmatprep.subr.mxu0 0.0
  %1360 = vmatpush1.msra.mxu0 0.0
  %1361 = vmatprep.subr.mxu0 0.0
  %1362 = vmatpush1.msra.mxu0 0.0
  %1363 = vmatprep.subr.mxu0 0.0
  %1364 = vmatpush1.msra.mxu0 0.0
  %1365 = vmatprep.mubr.f32.mxu0 0.0
  %1366 = vmatmul.mubr.f32.gmra.mrb[0].mxu0 %v1290
  %v1367 = vpop.f32.mrb[0].mxu0
  %v1368 = vadd.f32 0.0, %v1367
  %v1369 = vpop.f32.mrb[0].mxu0
  %1370 = vmatprep.mubr.f32.mxu0 0.0
  %1371 = vmatmul.mubr.f32.gmra.mrb[0].mxu0 %v1293
  %v1372 = vpop.f32.mrb[0].mxu0
  %v1373 = vadd.f32 0.0, %v1372
  %v1374 = vpop.f32.mrb[0].mxu0
  %1375 = vmatprep.mubr.f32.mxu0 0.0
  %1376 = vmatmul.mubr.f32.gmra.mrb[0].mxu0 %v1296
  %v1377 = vpop.f32.mrb[0].mxu0
  %v1378 = vadd.f32 0.0, %v1377
  %v1379 = vpop.f32.mrb[0].mxu0
  %1380 = vmatprep.mubr.f32.mxu0 0.0
  %1381 = vmatmul.mubr.f32.gmra.mrb[0].mxu0 %v1299
  %v1382 = vpop.f32.mrb[0].mxu0
  %v1383 = vadd.f32 0.0, %v1382
  %v1384 = vpop.f32.mrb[0].mxu0
  %1385 = vdwg.mxu0
  %v1386 = vadd.f32 %v1131, %v1368
  %v1387 = vadd.f32 %v1132, %v1373
  %v1388 = vadd.f32 %v1133, %v1378
  %v1389 = vadd.f32 %v1134, %v1383
  %v1390 = vld [vmem:[%s4 + $0x60] sm:$0xff]
  %v1391 = vld [vmem:[%s4 + $0x68] sm:$0xff]
  %v1392 = vld [vmem:[%s4 + $0x70] sm:$0xff]
  %v1393 = vld [vmem:[%s4 + $0x78] sm:$0xff]
  %v1394 = vld [vmem:[%s5 + $0x3] sm:$0x1]
  %v1395 = vlaneseq
  %v1396 = vshrl.u32 %v1395, 7
  %v1397 = vsub.s32 0, %v1396
  %v1398 = vrot.slane %v1394, %v1397
  %v1400 = vsel %vm76, %v1386, 0
  %v1403 = vsel %vm76, %v1387, 0
  %v1406 = vsel %vm76, %v1388, 0
  %v1409 = vsel %vm76, %v1389, 0
  %1411 = vmatprep.subr.mxu0 0.0
  %1412 = vmatpush1.msra.mxu0 %v1390
  %1413 = vmatprep.subr.mxu0 0.0
  %1414 = vmatpush1.msra.mxu0 %v1391
  %1415 = vmatprep.subr.mxu0 0.0
  %1416 = vmatpush1.msra.mxu0 %v1392
  %1417 = vmatprep.subr.mxu0 0.0
  %1418 = vmatpush1.msra.mxu0 %v1393
  %1419 = vmatprep.subr.mxu0 0.0
  %1420 = vmatpush1.msra.mxu0 0.0
  %1421 = vmatprep.subr.mxu0 0.0
  %1422 = vmatpush1.msra.mxu0 0.0
  %1423 = vmatprep.subr.mxu0 0.0
  %1424 = vmatpush1.msra.mxu0 0.0
  %1425 = vmatprep.subr.mxu0 0.0
  %1426 = vmatpush1.msra.mxu0 0.0
  %1427 = vmatprep.subr.mxu0 0.0
  %1428 = vmatpush1.msra.mxu0 0.0
  %1429 = vmatprep.subr.mxu0 0.0
  %1430 = vmatpush1.msra.mxu0 0.0
  %1431 = vmatprep.subr.mxu0 0.0
  %1432 = vmatpush1.msra.mxu0 0.0
  %1433 = vmatprep.subr.mxu0 0.0
  %1434 = vmatpush1.msra.mxu0 0.0
  %1435 = vmatprep.subr.mxu0 0.0
  %1436 = vmatpush1.msra.mxu0 0.0
  %1437 = vmatprep.subr.mxu0 0.0
  %1438 = vmatpush1.msra.mxu0 0.0
  %1439 = vmatprep.subr.mxu0 0.0
  %1440 = vmatpush1.msra.mxu0 0.0
  %1441 = vmatprep.subr.mxu0 0.0
  %1442 = vmatpush1.msra.mxu0 0.0
  %1443 = vmatprep.subr.mxu0 0.0
  %1444 = vmatpush1.msra.mxu0 0.0
  %1445 = vmatprep.subr.mxu0 0.0
  %1446 = vmatpush1.msra.mxu0 0.0
  %1447 = vmatprep.subr.mxu0 0.0
  %1448 = vmatpush1.msra.mxu0 0.0
  %1449 = vmatprep.subr.mxu0 0.0
  %1450 = vmatpush1.msra.mxu0 0.0
  %1451 = vmatprep.subr.mxu0 0.0
  %1452 = vmatpush1.msra.mxu0 0.0
  %1453 = vmatprep.subr.mxu0 0.0
  %1454 = vmatpush1.msra.mxu0 0.0
  %1455 = vmatprep.subr.mxu0 0.0
  %1456 = vmatpush1.msra.mxu0 0.0
  %1457 = vmatprep.subr.mxu0 0.0
  %1458 = vmatpush1.msra.mxu0 0.0
  %1459 = vmatprep.subr.mxu0 0.0
  %1460 = vmatpush1.msra.mxu0 0.0
  %1461 = vmatprep.subr.mxu0 0.0
  %1462 = vmatpush1.msra.mxu0 0.0
  %1463 = vmatprep.subr.mxu0 0.0
  %1464 = vmatpush1.msra.mxu0 0.0
  %1465 = vmatprep.subr.mxu0 0.0
  %1466 = vmatpush1.msra.mxu0 0.0
  %1467 = vmatprep.subr.mxu0 0.0
  %1468 = vmatpush1.msra.mxu0 0.0
  %1469 = vmatprep.subr.mxu0 0.0
  %1470 = vmatpush1.msra.mxu0 0.0
  %1471 = vmatprep.subr.mxu0 0.0
  %1472 = vmatpush1.msra.mxu0 0.0
  %1473 = vmatprep.subr.mxu0 0.0
  %1474 = vmatpush1.msra.mxu0 0.0
  %1475 = vmatprep.mubr.f32.mxu0 0.0
  %1476 = vmatmul.mubr.f32.gmra.mrb[0].mxu0 %v1400
  %v1477 = vpop.f32.mrb[0].mxu0
  %v1478 = vadd.f32 %v1398, %v1477
  %v1479 = vpop.f32.mrb[0].mxu0
  %1480 = vmatprep.mubr.f32.mxu0 0.0
  %1481 = vmatmul.mubr.f32.gmra.mrb[0].mxu0 %v1403
  %v1482 = vpop.f32.mrb[0].mxu0
  %v1483 = vadd.f32 %v1398, %v1482
  %v1484 = vpop.f32.mrb[0].mxu0
  %1485 = vmatprep.mubr.f32.mxu0 0.0
  %1486 = vmatmul.mubr.f32.gmra.mrb[0].mxu0 %v1406
  %v1487 = vpop.f32.mrb[0].mxu0
  %v1488 = vadd.f32 %v1398, %v1487
  %v1489 = vpop.f32.mrb[0].mxu0
  %1490 = vmatprep.mubr.f32.mxu0 0.0
  %1491 = vmatmul.mubr.f32.gmra.mrb[0].mxu0 %v1409
  %v1492 = vpop.f32.mrb[0].mxu0
  %v1493 = vadd.f32 %v1398, %v1492
  %v1494 = vpop.f32.mrb[0].mxu0
  %1495 = vdwg.mxu0
  %v1496 = vadd.f32 %v59, %v1478
  %v1497 = vadd.f32 %v60, %v1483
  %v1498 = vadd.f32 %v61, %v1488
  %v1499 = vadd.f32 %v62, %v1493
  %v1500 = vld [vmem:[%s5 + $0x6] sm:$0x1]
  %v1501 = vld [vmem:[%s5 + $0x7] sm:$0x1]
  %v1502 = vsel %vm76, %v1496, 0.0
  %1503 = vadd.xlane.f32.xlu0 %v1502
  %v1504 = vpop.xlane.xlu0 %1503
  %v1505 = vsel %vm76, %v1497, 0.0
  %1506 = vadd.xlane.f32.xlu0 %v1505
  %v1507 = vpop.xlane.xlu0 %1506
  %v1508 = vsel %vm76, %v1498, 0.0
  %1509 = vadd.xlane.f32.xlu0 %v1508
  %v1510 = vpop.xlane.xlu0 %1509
  %v1511 = vsel %vm76, %v1499, 0.0
  %1512 = vadd.xlane.f32.xlu0 %v1511
  %v1513 = vpop.xlane.xlu0 %1512
  %v1514 = vrcp.pop 32.0
  %v1515 = vmul.f32 %v1504, %v1514
  %v1516 = vmul.f32 %v1507, %v1514
  %v1517 = vmul.f32 %v1510, %v1514
  %v1518 = vmul.f32 %v1513, %v1514
  %v1519 = vsub.f32 %v1496, %v1515
  %v1520 = vsub.f32 %v1497, %v1516
  %v1521 = vsub.f32 %v1498, %v1517
  %v1522 = vsub.f32 %v1499, %v1518
  %v1523 = vmul.f32 %v1519, %v1519
  %v1524 = vmul.f32 %v1520, %v1520
  %v1525 = vmul.f32 %v1521, %v1521
  %v1526 = vmul.f32 %v1522, %v1522
  %v1527 = vsel %vm76, %v1523, 0.0
  %1528 = vadd.xlane.f32.xlu0 %v1527
  %v1529 = vpop.xlane.xlu0 %1528
  %v1530 = vsel %vm76, %v1524, 0.0
  %1531 = vadd.xlane.f32.xlu0 %v1530
  %v1532 = vpop.xlane.xlu0 %1531
  %v1533 = vsel %vm76, %v1525, 0.0
  %1534 = vadd.xlane.f32.xlu0 %v1533
  %v1535 = vpop.xlane.xlu0 %1534
  %v1536 = vsel %vm76, %v1526, 0.0
  %1537 = vadd.xlane.f32.xlu0 %v1536
  %v1538 = vpop.xlane.xlu0 %1537
  %v1539 = vmul.f32 %v1529, %v1514
  %v1540 = vmul.f32 %v1532, %v1514
  %v1541 = vmul.f32 %v1535, %v1514
  %v1542 = vmul.f32 %v1538, %v1514
  %v1543 = vadd.f32 %v1539, 1e-05
  %v1544 = vadd.f32 %v1540, 1e-05
  %v1545 = vadd.f32 %v1541, 1e-05
  %v1546 = vadd.f32 %v1542, 1e-05
  %v1547 = vrsqrt.pop %v1543
  %v1548 = vrsqrt.pop %v1544
  %v1549 = vrsqrt.pop %v1545
  %v1550 = vrsqrt.pop %v1546
  %v1551 = vmul.f32 %v1519, %v1547
  %v1552 = vmul.f32 %v1520, %v1548
  %v1553 = vmul.f32 %v1521, %v1549
  %v1554 = vmul.f32 %v1522, %v1550
  %v1555 = vlaneseq
  %v1556 = vshrl.u32 %v1555, 7
  %v1557 = vsub.s32 0, %v1556
  %v1558 = vrot.slane %v1500, %v1557
  %v1559 = vmul.f32 %v1551, %v1558
  %v1560 = vmul.f32 %v1552, %v1558
  %v1561 = vmul.f32 %v1553, %v1558
  %v1562 = vmul.f32 %v1554, %v1558
  %v1563 = vlaneseq
  %v1564 = vshrl.u32 %v1563, 7
  %v1565 = vsub.s32 0, %v1564
  %v1566 = vrot.slane %v1501, %v1565
  %v1567 = vadd.f32 %v1559, %v1566
  %v1568 = vadd.f32 %v1560, %v1566
  %v1569 = vadd.f32 %v1561, %v1566
  %v1570 = vadd.f32 %v1562, %v1566
  %v1571 = vld [vmem:[%s4 + $0x80] sm:$0xff]
  %v1572 = vld [vmem:[%s4 + $0x88] sm:$0xff]
  %v1573 = vld [vmem:[%s4 + $0x90] sm:$0xff]
  %v1574 = vld [vmem:[%s4 + $0x98] sm:$0xff]
  %v1575 = vld [vmem:[%s5 + $0x4] sm:$0x1]
  %v1576 = vlaneseq
  %v1577 = vshrl.u32 %v1576, 7
  %v1578 = vsub.s32 0, %v1577
  %v1579 = vrot.slane %v1575, %v1578
  %v1581 = vsel %vm76, %v1567, 0
  %v1584 = vsel %vm76, %v1568, 0
  %v1587 = vsel %vm76, %v1569, 0
  %v1590 = vsel %vm76, %v1570, 0
  %1592 = vmatprep.subr.mxu0 0.0
  %1593 = vmatpush1.msra.mxu0 %v1571
  %1594 = vmatprep.subr.mxu0 0.0
  %1595 = vmatpush1.msra.mxu0 %v1572
  %1596 = vmatprep.subr.mxu0 0.0
  %1597 = vmatpush1.msra.mxu0 %v1573
  %1598 = vmatprep.subr.mxu0 0.0
  %1599 = vmatpush1.msra.mxu0 %v1574
  %1600 = vmatprep.subr.mxu0 0.0
  %1601 = vmatpush1.msra.mxu0 0.0
  %1602 = vmatprep.subr.mxu0 0.0
  %1603 = vmatpush1.msra.mxu0 0.0
  %1604 = vmatprep.subr.mxu0 0.0
  %1605 = vmatpush1.msra.mxu0 0.0
  %1606 = vmatprep.subr.mxu0 0.0
  %1607 = vmatpush1.msra.mxu0 0.0
  %1608 = vmatprep.subr.mxu0 0.0
  %1609 = vmatpush1.msra.mxu0 0.0
  %1610 = vmatprep.subr.mxu0 0.0
  %1611 = vmatpush1.msra.mxu0 0.0
  %1612 = vmatprep.subr.mxu0 0.0
  %1613 = vmatpush1.msra.mxu0 0.0
  %1614 = vmatprep.subr.mxu0 0.0
  %1615 = vmatpush1.msra.mxu0 0.0
  %1616 = vmatprep.subr.mxu0 0.0
  %1617 = vmatpush1.msra.mxu0 0.0
  %1618 = vmatprep.subr.mxu0 0.0
  %1619 = vmatpush1.msra.mxu0 0.0
  %1620 = vmatprep.subr.mxu0 0.0
  %1621 = vmatpush1.msra.mxu0 0.0
  %1622 = vmatprep.subr.mxu0 0.0
  %1623 = vmatpush1.msra.mxu0 0.0
  %1624 = vmatprep.subr.mxu0 0.0
  %1625 = vmatpush1.msra.mxu0 0.0
  %1626 = vmatprep.subr.mxu0 0.0
  %1627 = vmatpush1.msra.mxu0 0.0
  %1628 = vmatprep.subr.mxu0 0.0
  %1629 = vmatpush1.msra.mxu0 0.0
  %1630 = vmatprep.subr.mxu0 0.0
  %1631 = vmatpush1.msra.mxu0 0.0
  %1632 = vmatprep.subr.mxu0 0.0
  %1633 = vmatpush1.msra.mxu0 0.0
  %1634 = vmatprep.subr.mxu0 0.0
  %1635 = vmatpush1.msra.mxu0 0.0
  %1636 = vmatprep.subr.mxu0 0.0
  %1637 = vmatpush1.msra.mxu0 0.0
  %1638 = vmatprep.subr.mxu0 0.0
  %1639 = vmatpush1.msra.mxu0 0.0
  %1640 = vmatprep.subr.mxu0 0.0
  %1641 = vmatpush1.msra.mxu0 0.0
  %1642 = vmatprep.subr.mxu0 0.0
  %1643 = vmatpush1.msra.mxu0 0.0
  %1644 = vmatprep.subr.mxu0 0.0
  %1645 = vmatpush1.msra.mxu0 0.0
  %1646 = vmatprep.subr.mxu0 0.0
  %1647 = vmatpush1.msra.mxu0 0.0
  %1648 = vmatprep.subr.mxu0 0.0
  %1649 = vmatpush1.msra.mxu0 0.0
  %1650 = vmatprep.subr.mxu0 0.0
  %1651 = vmatpush1.msra.mxu0 0.0
  %1652 = vmatprep.subr.mxu0 0.0
  %1653 = vmatpush1.msra.mxu0 0.0
  %1654 = vmatprep.subr.mxu0 0.0
  %1655 = vmatpush1.msra.mxu0 0.0
  %1656 = vmatprep.mubr.f32.mxu0 0.0
  %1657 = vmatmul.mubr.f32.gmra.mrb[0].mxu0 %v1581
  %v1658 = vpop.f32.mrb[0].mxu0
  %v1659 = vadd.f32 %v1579, %v1658
  %v1660 = vpop.f32.mrb[0].mxu0
  %1661 = vmatprep.mubr.f32.mxu0 0.0
  %1662 = vmatmul.mubr.f32.gmra.mrb[0].mxu0 %v1584
  %v1663 = vpop.f32.mrb[0].mxu0
  %v1664 = vadd.f32 %v1579, %v1663
  %v1665 = vpop.f32.mrb[0].mxu0
  %1666 = vmatprep.mubr.f32.mxu0 0.0
  %1667 = vmatmul.mubr.f32.gmra.mrb[0].mxu0 %v1587
  %v1668 = vpop.f32.mrb[0].mxu0
  %v1669 = vadd.f32 %v1579, %v1668
  %v1670 = vpop.f32.mrb[0].mxu0
  %1671 = vmatprep.mubr.f32.mxu0 0.0
  %1672 = vmatmul.mubr.f32.gmra.mrb[0].mxu0 %v1590
  %v1673 = vpop.f32.mrb[0].mxu0
  %v1674 = vadd.f32 %v1579, %v1673
  %v1675 = vpop.f32.mrb[0].mxu0
  %1676 = vdwg.mxu0
  %v1677 = vmax.f32 %v1659, 0.0
  %v1678 = vmax.f32 %v1664, 0.0
  %v1679 = vmax.f32 %v1669, 0.0
  %v1680 = vmax.f32 %v1674, 0.0
  %v1681 = vld [vmem:[%s4 + $0xa0] sm:$0xff]
  %v1682 = vld [vmem:[%s4 + $0xa8] sm:$0xff]
  %v1683 = vld [vmem:[%s4 + $0xb0] sm:$0xff]
  %v1684 = vld [vmem:[%s4 + $0xb8] sm:$0xff]
  %v1685 = vld [vmem:[%s4 + $0xc0] sm:$0xff]
  %v1686 = vld [vmem:[%s4 + $0xc8] sm:$0xff]
  %v1687 = vld [vmem:[%s4 + $0xd0] sm:$0xff]
  %v1688 = vld [vmem:[%s4 + $0xd8] sm:$0xff]
  %v1689 = vld [vmem:[%s5 + $0x5] sm:$0x1]
  %v1690 = vlaneseq
  %v1691 = vshrl.u32 %v1690, 7
  %v1692 = vsub.s32 0, %v1691
  %v1693 = vrot.slane %v1689, %v1692
  %vm1694 = vcmask 523264
  %v1696 = vsel %vm1694, %v1677, 0
  %v1699 = vsel %vm1694, %v1678, 0
  %v1702 = vsel %vm1694, %v1679, 0
  %v1705 = vsel %vm1694, %v1680, 0
  %1707 = vmatprep.subr.mxu0 0.0
  %1708 = vmatpush1.msra.mxu0 %v1681
  %1709 = vmatprep.subr.mxu0 0.0
  %1710 = vmatpush1.msra.mxu0 %v1682
  %1711 = vmatprep.subr.mxu0 0.0
  %1712 = vmatpush1.msra.mxu0 %v1683
  %1713 = vmatprep.subr.mxu0 0.0
  %1714 = vmatpush1.msra.mxu0 %v1684
  %1715 = vmatprep.subr.mxu0 0.0
  %1716 = vmatpush1.msra.mxu0 %v1685
  %1717 = vmatprep.subr.mxu0 0.0
  %1718 = vmatpush1.msra.mxu0 %v1686
  %1719 = vmatprep.subr.mxu0 0.0
  %1720 = vmatpush1.msra.mxu0 %v1687
  %1721 = vmatprep.subr.mxu0 0.0
  %1722 = vmatpush1.msra.mxu0 %v1688
  %1723 = vmatprep.subr.mxu0 0.0
  %1724 = vmatpush1.msra.mxu0 0.0
  %1725 = vmatprep.subr.mxu0 0.0
  %1726 = vmatpush1.msra.mxu0 0.0
  %1727 = vmatprep.subr.mxu0 0.0
  %1728 = vmatpush1.msra.mxu0 0.0
  %1729 = vmatprep.subr.mxu0 0.0
  %1730 = vmatpush1.msra.mxu0 0.0
  %1731 = vmatprep.subr.mxu0 0.0
  %1732 = vmatpush1.msra.mxu0 0.0
  %1733 = vmatprep.subr.mxu0 0.0
  %1734 = vmatpush1.msra.mxu0 0.0
  %1735 = vmatprep.subr.mxu0 0.0
  %1736 = vmatpush1.msra.mxu0 0.0
  %1737 = vmatprep.subr.mxu0 0.0
  %1738 = vmatpush1.msra.mxu0 0.0
  %1739 = vmatprep.subr.mxu0 0.0
  %1740 = vmatpush1.msra.mxu0 0.0
  %1741 = vmatprep.subr.mxu0 0.0
  %1742 = vmatpush1.msra.mxu0 0.0
  %1743 = vmatprep.subr.mxu0 0.0
  %1744 = vmatpush1.msra.mxu0 0.0
  %1745 = vmatprep.subr.mxu0 0.0
  %1746 = vmatpush1.msra.mxu0 0.0
  %1747 = vmatprep.subr.mxu0 0.0
  %1748 = vmatpush1.msra.mxu0 0.0
  %1749 = vmatprep.subr.mxu0 0.0
  %1750 = vmatpush1.msra.mxu0 0.0
  %1751 = vmatprep.subr.mxu0 0.0
  %1752 = vmatpush1.msra.mxu0 0.0
  %1753 = vmatprep.subr.mxu0 0.0
  %1754 = vmatpush1.msra.mxu0 0.0
  %1755 = vmatprep.subr.mxu0 0.0
  %1756 = vmatpush1.msra.mxu0 0.0
  %1757 = vmatprep.subr.mxu0 0.0
  %1758 = vmatpush1.msra.mxu0 0.0
  %1759 = vmatprep.subr.mxu0 0.0
  %1760 = vmatpush1.msra.mxu0 0.0
  %1761 = vmatprep.subr.mxu0 0.0
  %1762 = vmatpush1.msra.mxu0 0.0
  %1763 = vmatprep.subr.mxu0 0.0
  %1764 = vmatpush1.msra.mxu0 0.0
  %1765 = vmatprep.subr.mxu0 0.0
  %1766 = vmatpush1.msra.mxu0 0.0
  %1767 = vmatprep.subr.mxu0 0.0
  %1768 = vmatpush1.msra.mxu0 0.0
  %1769 = vmatprep.subr.mxu0 0.0
  %1770 = vmatpush1.msra.mxu0 0.0
  %1771 = vmatprep.mubr.f32.mxu0 0.0
  %1772 = vmatmul.mubr.f32.gmra.mrb[0].mxu0 %v1696
  %v1773 = vpop.f32.mrb[0].mxu0
  %v1774 = vadd.f32 %v1693, %v1773
  %v1775 = vpop.f32.mrb[0].mxu0
  %1776 = vmatprep.mubr.f32.mxu0 0.0
  %1777 = vmatmul.mubr.f32.gmra.mrb[0].mxu0 %v1699
  %v1778 = vpop.f32.mrb[0].mxu0
  %v1779 = vadd.f32 %v1693, %v1778
  %v1780 = vpop.f32.mrb[0].mxu0
  %1781 = vmatprep.mubr.f32.mxu0 0.0
  %1782 = vmatmul.mubr.f32.gmra.mrb[0].mxu0 %v1702
  %v1783 = vpop.f32.mrb[0].mxu0
  %v1784 = vadd.f32 %v1693, %v1783
  %v1785 = vpop.f32.mrb[0].mxu0
  %1786 = vmatprep.mubr.f32.mxu0 0.0
  %1787 = vmatmul.mubr.f32.gmra.mrb[0].mxu0 %v1705
  %v1788 = vpop.f32.mrb[0].mxu0
  %v1789 = vadd.f32 %v1693, %v1788
  %v1790 = vpop.f32.mrb[0].mxu0
  %1791 = vdwg.mxu0
  %v1792 = vadd.f32 %v1567, %v1774
  %v1793 = vadd.f32 %v1568, %v1779
  %v1794 = vadd.f32 %v1569, %v1784
  %v1795 = vadd.f32 %v1570, %v1789
  %v1796 = vld [vmem:[%s5 + $0x8] sm:$0x1]
  %v1797 = vld [vmem:[%s5 + $0x9] sm:$0x1]
  %v1798 = vsel %vm76, %v1792, 0.0
  %1799 = vadd.xlane.f32.xlu0 %v1798
  %v1800 = vpop.xlane.xlu0 %1799
  %v1801 = vsel %vm76, %v1793, 0.0
  %1802 = vadd.xlane.f32.xlu0 %v1801
  %v1803 = vpop.xlane.xlu0 %1802
  %v1804 = vsel %vm76, %v1794, 0.0
  %1805 = vadd.xlane.f32.xlu0 %v1804
  %v1806 = vpop.xlane.xlu0 %1805
  %v1807 = vsel %vm76, %v1795, 0.0
  %1808 = vadd.xlane.f32.xlu0 %v1807
  %v1809 = vpop.xlane.xlu0 %1808
  %v1810 = vmul.f32 %v1800, %v1514
  %v1811 = vmul.f32 %v1803, %v1514
  %v1812 = vmul.f32 %v1806, %v1514
  %v1813 = vmul.f32 %v1809, %v1514
  %v1814 = vsub.f32 %v1792, %v1810
  %v1815 = vsub.f32 %v1793, %v1811
  %v1816 = vsub.f32 %v1794, %v1812
  %v1817 = vsub.f32 %v1795, %v1813
  %v1818 = vmul.f32 %v1814, %v1814
  %v1819 = vmul.f32 %v1815, %v1815
  %v1820 = vmul.f32 %v1816, %v1816
  %v1821 = vmul.f32 %v1817, %v1817
  %v1822 = vsel %vm76, %v1818, 0.0
  %1823 = vadd.xlane.f32.xlu0 %v1822
  %v1824 = vpop.xlane.xlu0 %1823
  %v1825 = vsel %vm76, %v1819, 0.0
  %1826 = vadd.xlane.f32.xlu0 %v1825
  %v1827 = vpop.xlane.xlu0 %1826
  %v1828 = vsel %vm76, %v1820, 0.0
  %1829 = vadd.xlane.f32.xlu0 %v1828
  %v1830 = vpop.xlane.xlu0 %1829
  %v1831 = vsel %vm76, %v1821, 0.0
  %1832 = vadd.xlane.f32.xlu0 %v1831
  %v1833 = vpop.xlane.xlu0 %1832
  %v1834 = vmul.f32 %v1824, %v1514
  %v1835 = vmul.f32 %v1827, %v1514
  %v1836 = vmul.f32 %v1830, %v1514
  %v1837 = vmul.f32 %v1833, %v1514
  %v1838 = vadd.f32 %v1834, 1e-05
  %v1839 = vadd.f32 %v1835, 1e-05
  %v1840 = vadd.f32 %v1836, 1e-05
  %v1841 = vadd.f32 %v1837, 1e-05
  %v1842 = vrsqrt.pop %v1838
  %v1843 = vrsqrt.pop %v1839
  %v1844 = vrsqrt.pop %v1840
  %v1845 = vrsqrt.pop %v1841
  %v1846 = vmul.f32 %v1814, %v1842
  %v1847 = vmul.f32 %v1815, %v1843
  %v1848 = vmul.f32 %v1816, %v1844
  %v1849 = vmul.f32 %v1817, %v1845
  %v1850 = vlaneseq
  %v1851 = vshrl.u32 %v1850, 7
  %v1852 = vsub.s32 0, %v1851
  %v1853 = vrot.slane %v1796, %v1852
  %v1854 = vmul.f32 %v1846, %v1853
  %v1855 = vmul.f32 %v1847, %v1853
  %v1856 = vmul.f32 %v1848, %v1853
  %v1857 = vmul.f32 %v1849, %v1853
  %v1858 = vlaneseq
  %v1859 = vshrl.u32 %v1858, 7
  %v1860 = vsub.s32 0, %v1859
  %v1861 = vrot.slane %v1797, %v1860
  %v1862 = vadd.f32 %v1854, %v1861
  %v1863 = vadd.f32 %v1855, %v1861
  %v1864 = vadd.f32 %v1856, %v1861
  %v1865 = vadd.f32 %v1857, %v1861
  %v1866 = vld [vmem:[%s4 + $0xe0] sm:$0xff]
  %v1867 = vld [vmem:[%s4 + $0xe8] sm:$0xff]
  %v1868 = vld [vmem:[%s4 + $0xf0] sm:$0xff]
  %v1869 = vld [vmem:[%s4 + $0xf8] sm:$0xff]
  %v1870 = vld [vmem:[%s5 + $0xa] sm:$0x1]
  %v1871 = vlaneseq
  %v1872 = vshrl.u32 %v1871, 7
  %v1873 = vsub.s32 0, %v1872
  %v1874 = vrot.slane %v1870, %v1873
  %v1876 = vsel %vm76, %v1862, 0
  %v1879 = vsel %vm76, %v1863, 0
  %v1882 = vsel %vm76, %v1864, 0
  %v1885 = vsel %vm76, %v1865, 0
  %1887 = vmatprep.subr.mxu0 0.0
  %1888 = vmatpush1.msra.mxu0 %v1866
  %1889 = vmatprep.subr.mxu0 0.0
  %1890 = vmatpush1.msra.mxu0 %v1867
  %1891 = vmatprep.subr.mxu0 0.0
  %1892 = vmatpush1.msra.mxu0 %v1868
  %1893 = vmatprep.subr.mxu0 0.0
  %1894 = vmatpush1.msra.mxu0 %v1869
  %1895 = vmatprep.subr.mxu0 0.0
  %1896 = vmatpush1.msra.mxu0 0.0
  %1897 = vmatprep.subr.mxu0 0.0
  %1898 = vmatpush1.msra.mxu0 0.0
  %1899 = vmatprep.subr.mxu0 0.0
  %1900 = vmatpush1.msra.mxu0 0.0
  %1901 = vmatprep.subr.mxu0 0.0
  %1902 = vmatpush1.msra.mxu0 0.0
  %1903 = vmatprep.subr.mxu0 0.0
  %1904 = vmatpush1.msra.mxu0 0.0
  %1905 = vmatprep.subr.mxu0 0.0
  %1906 = vmatpush1.msra.mxu0 0.0
  %1907 = vmatprep.subr.mxu0 0.0
  %1908 = vmatpush1.msra.mxu0 0.0
  %1909 = vmatprep.subr.mxu0 0.0
  %1910 = vmatpush1.msra.mxu0 0.0
  %1911 = vmatprep.subr.mxu0 0.0
  %1912 = vmatpush1.msra.mxu0 0.0
  %1913 = vmatprep.subr.mxu0 0.0
  %1914 = vmatpush1.msra.mxu0 0.0
  %1915 = vmatprep.subr.mxu0 0.0
  %1916 = vmatpush1.msra.mxu0 0.0
  %1917 = vmatprep.subr.mxu0 0.0
  %1918 = vmatpush1.msra.mxu0 0.0
  %1919 = vmatprep.subr.mxu0 0.0
  %1920 = vmatpush1.msra.mxu0 0.0
  %1921 = vmatprep.subr.mxu0 0.0
  %1922 = vmatpush1.msra.mxu0 0.0
  %1923 = vmatprep.subr.mxu0 0.0
  %1924 = vmatpush1.msra.mxu0 0.0
  %1925 = vmatprep.subr.mxu0 0.0
  %1926 = vmatpush1.msra.mxu0 0.0
  %1927 = vmatprep.subr.mxu0 0.0
  %1928 = vmatpush1.msra.mxu0 0.0
  %1929 = vmatprep.subr.mxu0 0.0
  %1930 = vmatpush1.msra.mxu0 0.0
  %1931 = vmatprep.subr.mxu0 0.0
  %1932 = vmatpush1.msra.mxu0 0.0
  %1933 = vmatprep.subr.mxu0 0.0
  %1934 = vmatpush1.msra.mxu0 0.0
  %1935 = vmatprep.subr.mxu0 0.0
  %1936 = vmatpush1.msra.mxu0 0.0
  %1937 = vmatprep.subr.mxu0 0.0
  %1938 = vmatpush1.msra.mxu0 0.0
  %1939 = vmatprep.subr.mxu0 0.0
  %1940 = vmatpush1.msra.mxu0 0.0
  %1941 = vmatprep.subr.mxu0 0.0
  %1942 = vmatpush1.msra.mxu0 0.0
  %1943 = vmatprep.subr.mxu0 0.0
  %1944 = vmatpush1.msra.mxu0 0.0
  %1945 = vmatprep.subr.mxu0 0.0
  %1946 = vmatpush1.msra.mxu0 0.0
  %1947 = vmatprep.subr.mxu0 0.0
  %1948 = vmatpush1.msra.mxu0 0.0
  %1949 = vmatprep.subr.mxu0 0.0
  %1950 = vmatpush1.msra.mxu0 0.0
  %1951 = vmatprep.mubr.f32.mxu0 0.0
  %1952 = vmatmul.mubr.f32.gmra.mrb[0].mxu0 %v1876
  %v1953 = vpop.f32.mrb[0].mxu0
  %v1954 = vadd.f32 %v1874, %v1953
  %v1955 = vpop.f32.mrb[0].mxu0
  %1956 = vmatprep.mubr.f32.mxu0 0.0
  %1957 = vmatmul.mubr.f32.gmra.mrb[0].mxu0 %v1879
  %v1958 = vpop.f32.mrb[0].mxu0
  %v1959 = vadd.f32 %v1874, %v1958
  %v1960 = vpop.f32.mrb[0].mxu0
  %1961 = vmatprep.mubr.f32.mxu0 0.0
  %1962 = vmatmul.mubr.f32.gmra.mrb[0].mxu0 %v1882
  %v1963 = vpop.f32.mrb[0].mxu0
  %v1964 = vadd.f32 %v1874, %v1963
  %v1965 = vpop.f32.mrb[0].mxu0
  %1966 = vmatprep.mubr.f32.mxu0 0.0
  %1967 = vmatmul.mubr.f32.gmra.mrb[0].mxu0 %v1885
  %v1968 = vpop.f32.mrb[0].mxu0
  %v1969 = vadd.f32 %v1874, %v1968
  %v1970 = vpop.f32.mrb[0].mxu0
  %1971 = vdwg.mxu0
  %v1972 = vmul.f32 %v1954, %v42
  %v1973 = vmul.f32 %v1959, %v47
  %v1974 = vmul.f32 %v1964, %v52
  %v1975 = vmul.f32 %v1969, %v57
  %1976 = vst.msk [vmem:[%s6] sm:$0xff] %vm76, %v1972
  %1977 = vst.msk [vmem:[%s6 + $0x8] sm:$0xff] %vm76, %v1973
  %1978 = vst.msk [vmem:[%s6 + $0x10] sm:$0xff] %vm76, %v1974
  %1979 = vst.msk [vmem:[%s6 + $0x18] sm:$0xff] %vm76, %v1975
  // Predicated region
  $region26: #{transformer_model_forward.1} parent=0 // pred_check
    _
  $region27: #{transformer_model_forward.1} parent=0 // pred_check_branch
    %1981 = sbr.rel (0) target = $region29
  $region28: #{transformer_model_forward.1} parent=0 // pred_region
    _
  $region29: #{transformer_model_forward.1} parent=0 // pred_fallthru
    _
  // Predicated region
  $region30: #{transformer_model_forward.1} parent=0 // pred_check
    _
  $region31: #{transformer_model_forward.1} parent=0 // pred_check_branch
    %1983 = sbr.rel (0) target = $region33
  $region32: #{transformer_model_forward.1} parent=0 // pred_region
    _
  $region33: #{transformer_model_forward.1} parent=0 // pred_fallthru
    _

</llo_original>
